<compile_context>
chip_gen: v7x
topology: tpu7x:2x2x1
jax: 0.10.0
libtpu: 0.0.40
codegen_flags: <defaults>
</compile_context>

<pallas_src>
import math

import jax
import jax.numpy as jnp
from jax.experimental import pallas as pl
from jax.experimental.pallas import tpu as pltpu


# ----------------------------- Pallas kernel ------------------------------- #

def _topyneck_kernel(x_ref, wx_ref, wyg_ref, wT_ref, bias_ref, o_ref, rhs_ref):
    """One voxel-tile grid step.

    x_ref    : (B*C, L*P) bf16  feature stack, VMEM-resident (constant block)
    wx_ref   : (L, W, TN) f32   1-D bilinear factors along width
    wyg_ref  : (L, H, TN) f32   1-D bilinear factors along height * layer gate
    wT_ref   : (C, TN)    f32   per-voxel readout weights (1/(C*L) folded in)
    bias_ref : (1, TN)    f32   per-voxel readout bias
    o_ref    : (B, TN)          output
    rhs_ref  : (L*P, TN)  bf16  VMEM scratch: reconstructed dense sampling tile
    """
    L, W, TN = wx_ref.shape
    H = wyg_ref.shape[1]
    P = H * W
    C = wT_ref.shape[0]
    B = o_ref.shape[0]

    # Rebuild the dense sampling weights for this voxel tile from the streamed
    # separable factors (gate already folded, multiply in f32, single bf16
    # rounding here).  Rank-1 outer product per layer on the VPU.
    for l in range(L):                                   # L is small & static
        sw = wyg_ref[l][:, None, :] * wx_ref[l][None, :, :]        # (H, W, TN) f32
        rhs_ref[pl.ds(l * P, P), :] = sw.reshape(P, TN).astype(rhs_ref.dtype)

    # Single MXU matmul with K = L*P (layer sum + spatial sample + gate in one).
    acc = jnp.dot(x_ref[...], rhs_ref[...],
                  preferred_element_type=jnp.float32)              # (B*C, TN)

    # Per-voxel channel readout (scale pre-folded into wT) + bias.
    z = jnp.sum(acc.reshape(B, C, TN) * wT_ref[...][None, :, :], axis=1)  # (B, TN)
    o_ref[...] = (z + bias_ref[...]).astype(o_ref.dtype)


def _padded_block_bytes(shape, dtype):
    """Approximate VMEM bytes of one tiled buffer holding this block."""
    itemsize = jnp.dtype(dtype).itemsize
    sub_tile = 8 * max(1, 4 // itemsize)          # 8 sublanes for f32, 16 for bf16
    lanes = -(-shape[-1] // 128) * 128
    subs = -(-shape[-2] // sub_tile) * sub_tile
    lead = math.prod(shape[:-2]) if len(shape) > 2 else 1
    return lead * subs * lanes * itemsize


def topyneck_pallas(x2, wx, wyg, wT, bias2, *, tile_n=256):
    """x2: (B*C, L*P) bf16; wx: (L,W,N) f32; wyg: (L,H,N) f32;
       wT: (C,N) f32 (pre-scaled); bias2: (1,N) f32  ->  out (B,N) f32."""
    BC, LP = x2.shape
    L, W, N = wx.shape
    H = wyg.shape[1]
    P = H * W
    C = wT.shape[0]
    B = BC // C
    assert LP == L * P and BC == B * C
    assert N % tile_n == 0, "pad voxel count to a multiple of tile_n"

    # Explicit VMEM budget from the real block sizes (double-buffered pipeline
    # blocks + the scratch tile + headroom for compiler temporaries).
    block_list = [((BC, LP), x2.dtype), ((L, W, tile_n), wx.dtype),
                  ((L, H, tile_n), wyg.dtype), ((C, tile_n), wT.dtype),
                  ((1, tile_n), bias2.dtype), ((B, tile_n), jnp.float32)]
    vmem_limit = 2 * sum(_padded_block_bytes(s, d) for s, d in block_list)
    vmem_limit += _padded_block_bytes((L * P, tile_n), jnp.bfloat16)
    vmem_limit = int(max(vmem_limit + (16 << 20), 32 << 20))

    return pl.pallas_call(
        _topyneck_kernel,
        out_shape=jax.ShapeDtypeStruct((B, N), jnp.float32),
        grid_spec=pltpu.PrefetchScalarGridSpec(
            num_scalar_prefetch=0,
            grid=(N // tile_n,),
            in_specs=[
                # Constant index_map: feature stack fetched once, stays resident.
                pl.BlockSpec((BC, LP), lambda i: (0, 0)),
                pl.BlockSpec((L, W, tile_n), lambda i: (0, 0, i)),
                pl.BlockSpec((L, H, tile_n), lambda i: (0, 0, i)),
                pl.BlockSpec((C, tile_n), lambda i: (0, i)),
                pl.BlockSpec((1, tile_n), lambda i: (0, i)),
            ],
            out_specs=pl.BlockSpec((B, tile_n), lambda i: (0, i)),
            scratch_shapes=[pltpu.VMEM((L * P, tile_n), jnp.bfloat16)],
        ),
        compiler_params=pltpu.CompilerParams(
            dimension_semantics=("parallel",),
            vmem_limit_bytes=vmem_limit),
    )(x2, wx, wyg, wT, bias2)


# ------------------------------ JAX glue ----------------------------------- #

def _gelu(x):
    return jax.nn.gelu(x, approximate=False)   # matches nn.GELU()


def bilinear_line_weights(g, size):
    """1-D bilinear weights for grid_sample(mode='bilinear',
    padding_mode='zeros', align_corners=False).  g: (N,) in [-1, 1]."""
    ix = ((g + 1.0) * size - 1.0) * 0.5
    i0f = jnp.floor(ix)
    w1 = ix - i0f
    w0 = 1.0 - w1
    i0 = i0f.astype(jnp.int32)
    i1 = i0 + 1
    v0 = ((i0 >= 0) & (i0 < size)).astype(g.dtype)
    v1 = ((i1 >= 0) & (i1 < size)).astype(g.dtype)
    oh0 = jax.nn.one_hot(jnp.clip(i0, 0, size - 1), size, dtype=g.dtype)
    oh1 = jax.nn.one_hot(jnp.clip(i1, 0, size - 1), size, dtype=g.dtype)
    return oh0 * (w0 * v0)[:, None] + oh1 * (w1 * v1)[:, None]   # (N, size)


def init_params(key, coord_dim, width, L, C, N, gate_width):
    ks = jax.random.split(key, 10)
    p = {
        # NeuronProjector (SEPARATE_LAYERS=True, DEPTH=2): Linear->GELU->Linear->Tanh
        "proj_W1": 0.3 * jax.random.normal(ks[0], (L, coord_dim, width), jnp.float32),
        "proj_b1": 0.1 * jax.random.normal(ks[1], (L, width), jnp.float32),
        "proj_W2": 0.3 * jax.random.normal(ks[2], (L, width, 2), jnp.float32),
        "proj_b2": 0.1 * jax.random.normal(ks[3], (L, 2), jnp.float32),
        # layer gate (DEPTH=2): Linear->GELU->Linear->Softmax
        "gate_W1": 0.3 * jax.random.normal(ks[4], (coord_dim, gate_width), jnp.float32),
        "gate_b1": 0.1 * jax.random.normal(ks[5], (gate_width,), jnp.float32),
        "gate_W2": 0.3 * jax.random.normal(ks[6], (gate_width, L), jnp.float32),
        "gate_b2": 0.1 * jax.random.normal(ks[7], (L,), jnp.float32),
        # VoxelOutBlock depth=1: per-voxel weight (N, C) / bias (N,)
        "vout_W": 0.3 * jax.random.normal(ks[8], (N, C), jnp.float32),
        "vout_b": 0.1 * jax.random.normal(ks[9], (N,), jnp.float32),
    }
    return p


def topyneck_forward(x_dict, coords, params, tile_n=256):
    layers = list(x_dict.keys())
    L = len(layers)
    x_stack = jnp.stack([x_dict[k] for k in layers], axis=0)   # (L, B, C, H, W)
    _, B, C, H, W = x_stack.shape
    P = H * W
    N = coords.shape[0]

    # Resident MXU LHS: (B*C, L*P) with b-major rows and (l, h, w) column order
    # so the kernel does a single K=L*P matmul.  bf16 stream, f32 accumulate.
    x2 = jnp.transpose(x_stack, (1, 2, 0, 3, 4)).reshape(B * C, L * P)
    x2 = x2.astype(jnp.bfloat16)

    # NeuronProjector mu per layer (eval mode: no noise, no training regs).
    # TODO(synk): eye_shifter branch skipped (eye_coords=None path).
    wx_list, wy_list = [], []
    for li in range(L):
        h = _gelu(coords @ params["proj_W1"][li] + params["proj_b1"][li])
        mu = jnp.tanh(h @ params["proj_W2"][li] + params["proj_b2"][li])  # (N, 2)
        gx, gy = mu[:, 0], mu[:, 1]        # grid last dim = (x=width, y=height)
        wx_list.append(bilinear_line_weights(gx, W))  # (N, W)
        wy_list.append(bilinear_line_weights(gy, H))  # (N, H)
    wx_k = jnp.stack(wx_list, axis=0)                 # (L, N, W) f32
    wy_k = jnp.stack(wy_list, axis=0)                 # (L, N, H) f32

    # Dense sampling weights built only for the host-side reference check.
    samp_w = (wy_k[:, :, :, None] * wx_k[:, :, None, :]).reshape(L, N, P)

    # Layer gate, folded into the H-side factor in f32 (single bf16 rounding
    # happens inside the kernel when the dense tile is materialized).
    hg = _gelu(coords @ params["gate_W1"] + params["gate_b1"])
    gate = jax.nn.softmax(hg @ params["gate_W2"] + params["gate_b2"], axis=-1)  # (N, L)
    wyg = jnp.transpose(wy_k, (0, 2, 1)) * jnp.transpose(gate)[:, None, :]      # (L, H, N)
    wxT = jnp.transpose(wx_k, (0, 2, 1))                                        # (L, W, N)

    # Per-voxel readout with the 1/(C*L) normalization folded in.
    wT_scaled = jnp.transpose(params["vout_W"]) * (1.0 / (C * L))   # (C, N) f32
    bias2 = params["vout_b"][None, :]                               # (1, N) f32

    out = topyneck_pallas(x2, wxT, wyg, wT_scaled, bias2, tile_n=tile_n)  # (B, N)
    return out, samp_w, gate


def reference(x_flat, samp_w, gate, w_out, b_out):
    L, B, C, P = x_flat.shape
    sample = jnp.einsum('lbcp,lnp->lbnc', x_flat, samp_w,
                        precision=jax.lax.Precision.HIGHEST)
    y = jnp.einsum('lbnc,nl->bnc', sample, gate,
                   precision=jax.lax.Precision.HIGHEST) / L
    out = jnp.einsum('bnc,nc->bn', y, w_out,
                     precision=jax.lax.Precision.HIGHEST) / C + b_out[None, :]
    return out


# --------------------------------- main ------------------------------------ #

if __name__ == "__main__":
    B, C, H, W = 2, 32, 16, 16      # C = cfg.MODEL.NECK.CONV_HEAD.WIDTH
    N = 512                         # num voxels (single subject)
    L = 3                           # len(layer_list)
    coord_dim = 3                   # neuron_coords.shape[-1]
    width, gate_width = 32, 32
    tile_n = 256                    # 256-wide MXU tiles; N//tile_n = 2 parallel tiles

    key = jax.random.PRNGKey(0)
    k_x, k_c, k_p = jax.random.split(key, 3)
    xs = jax.random.normal(k_x, (L, B, C, H, W), jnp.float32)   # NCHW features
    x_dict = {f"layer{i}": xs[i] for i in range(L)}
    coords = jax.random.uniform(k_c, (N, coord_dim), jnp.float32, -1.0, 1.0)
    params = init_params(k_p, coord_dim, width, L, C, N, gate_width)

    out, samp_w, gate = topyneck_forward(x_dict, coords, params, tile_n=tile_n)
    out = jax.block_until_ready(out)

    ref = reference(xs.reshape(L, B, C, H * W), samp_w, gate,
                    params["vout_W"], params["vout_b"])
    assert out.shape == (B, N)
    max_err = float(jnp.max(jnp.abs(out - ref)))
    # x and the reconstructed sampling tile are bf16 on the MXU (f32 accumulate,
    # f32 gate/readout math), so keep a slightly widened tolerance.
    assert jnp.allclose(out, ref, atol=2e-2, rtol=2e-2), max_err
    print("KERNEL_OK")
</pallas_src>

<mosaic_0001>
module attributes {stable_mosaic.version = 11 : i64} {
  func.func @_topyneck_kernel(%arg0: i32, %arg1: memref<64x768xbf16, #tpu.memory_space<vmem>>, %arg2: memref<3x16x256xf32, #tpu.memory_space<vmem>>, %arg3: memref<3x16x256xf32, #tpu.memory_space<vmem>>, %arg4: memref<32x256xf32, #tpu.memory_space<vmem>>, %arg5: memref<1x256xf32, #tpu.memory_space<vmem>>, %arg6: memref<2x256xf32, #tpu.memory_space<vmem>>, %arg7: memref<768x256xbf16, #tpu.memory_space<vmem>>) attributes {dimension_semantics = [#tpu.dimension_semantics<parallel>], iteration_bounds = array<i64: 2>, scalar_prefetch = 0 : i64, scratch_operands = 1 : i64, tpu.core_type = #tpu.core_type<tc>, window_params = [{pipeline_mode = #tpu.pipeline_mode<synchronous>, transform_indices = @transform_0, window_bounds = array<i64: 64, 768>}, {transform_indices = @transform_1, window_bounds = array<i64: 3, 16, 256>}, {transform_indices = @transform_2, window_bounds = array<i64: 3, 16, 256>}, {transform_indices = @transform_3, window_bounds = array<i64: 32, 256>}, {transform_indices = @transform_4, window_bounds = array<i64: 1, 256>}, {transform_indices = @transform_5, window_bounds = array<i64: 2, 256>}]} {
    %c0 = arith.constant 0 : index
    %c0_0 = arith.constant 0 : index
    %c0_1 = arith.constant 0 : index
    %0 = vector.load %arg3[%c0, %c0_0, %c0_1] : memref<3x16x256xf32, #tpu.memory_space<vmem>>, vector<1x16x256xf32>
    %1 = vector.shape_cast %0 : vector<1x16x256xf32> to vector<16x256xf32>
    %2 = vector.shape_cast %1 : vector<16x256xf32> to vector<16x1x256xf32>
    %c0_2 = arith.constant 0 : index
    %c0_3 = arith.constant 0 : index
    %c0_4 = arith.constant 0 : index
    %3 = vector.load %arg2[%c0_2, %c0_3, %c0_4] : memref<3x16x256xf32, #tpu.memory_space<vmem>>, vector<1x16x256xf32>
    %4 = vector.shape_cast %3 : vector<1x16x256xf32> to vector<16x256xf32>
    %5 = vector.shape_cast %4 : vector<16x256xf32> to vector<1x16x256xf32>
    %6 = vector.broadcast %2 : vector<16x1x256xf32> to vector<16x16x256xf32>
    %7 = vector.broadcast %5 : vector<1x16x256xf32> to vector<16x16x256xf32>
    %8 = arith.mulf %6, %7 : vector<16x16x256xf32>
    %9 = vector.shape_cast %8 : vector<16x16x256xf32> to vector<256x256xf32>
    %10 = arith.truncf %9 : vector<256x256xf32> to vector<256x256xbf16>
    %c0_5 = arith.constant 0 : index
    %c0_6 = arith.constant 0 : index
    %11 = vector.load %arg7[%c0_5, %c0_6] : memref<768x256xbf16, #tpu.memory_space<vmem>>, vector<256x256xbf16>
    tpu.vector_store %arg7[%c0_5, %c0_6], %10 {strides = array<i32>} : memref<768x256xbf16, #tpu.memory_space<vmem>>, vector<256x256xbf16>,
    %c1 = arith.constant 1 : index
    %c0_7 = arith.constant 0 : index
    %c0_8 = arith.constant 0 : index
    %12 = vector.load %arg3[%c1, %c0_7, %c0_8] : memref<3x16x256xf32, #tpu.memory_space<vmem>>, vector<1x16x256xf32>
    %13 = vector.shape_cast %12 : vector<1x16x256xf32> to vector<16x256xf32>
    %14 = vector.shape_cast %13 : vector<16x256xf32> to vector<16x1x256xf32>
    %c1_9 = arith.constant 1 : index
    %c0_10 = arith.constant 0 : index
    %c0_11 = arith.constant 0 : index
    %15 = vector.load %arg2[%c1_9, %c0_10, %c0_11] : memref<3x16x256xf32, #tpu.memory_space<vmem>>, vector<1x16x256xf32>
    %16 = vector.shape_cast %15 : vector<1x16x256xf32> to vector<16x256xf32>
    %17 = vector.shape_cast %16 : vector<16x256xf32> to vector<1x16x256xf32>
    %18 = vector.broadcast %14 : vector<16x1x256xf32> to vector<16x16x256xf32>
    %19 = vector.broadcast %17 : vector<1x16x256xf32> to vector<16x16x256xf32>
    %20 = arith.mulf %18, %19 : vector<16x16x256xf32>
    %21 = vector.shape_cast %20 : vector<16x16x256xf32> to vector<256x256xf32>
    %22 = arith.truncf %21 : vector<256x256xf32> to vector<256x256xbf16>
    %c256 = arith.constant 256 : index
    %c0_12 = arith.constant 0 : index
    %23 = vector.load %arg7[%c256, %c0_12] : memref<768x256xbf16, #tpu.memory_space<vmem>>, vector<256x256xbf16>
    tpu.vector_store %arg7[%c256, %c0_12], %22 {strides = array<i32>} : memref<768x256xbf16, #tpu.memory_space<vmem>>, vector<256x256xbf16>,
    %c2 = arith.constant 2 : index
    %c0_13 = arith.constant 0 : index
    %c0_14 = arith.constant 0 : index
    %24 = vector.load %arg3[%c2, %c0_13, %c0_14] : memref<3x16x256xf32, #tpu.memory_space<vmem>>, vector<1x16x256xf32>
    %25 = vector.shape_cast %24 : vector<1x16x256xf32> to vector<16x256xf32>
    %26 = vector.shape_cast %25 : vector<16x256xf32> to vector<16x1x256xf32>
    %c2_15 = arith.constant 2 : index
    %c0_16 = arith.constant 0 : index
    %c0_17 = arith.constant 0 : index
    %27 = vector.load %arg2[%c2_15, %c0_16, %c0_17] : memref<3x16x256xf32, #tpu.memory_space<vmem>>, vector<1x16x256xf32>
    %28 = vector.shape_cast %27 : vector<1x16x256xf32> to vector<16x256xf32>
    %29 = vector.shape_cast %28 : vector<16x256xf32> to vector<1x16x256xf32>
    %30 = vector.broadcast %26 : vector<16x1x256xf32> to vector<16x16x256xf32>
    %31 = vector.broadcast %29 : vector<1x16x256xf32> to vector<16x16x256xf32>
    %32 = arith.mulf %30, %31 : vector<16x16x256xf32>
    %33 = vector.shape_cast %32 : vector<16x16x256xf32> to vector<256x256xf32>
    %34 = arith.truncf %33 : vector<256x256xf32> to vector<256x256xbf16>
    %c512 = arith.constant 512 : index
    %c0_18 = arith.constant 0 : index
    %35 = vector.load %arg7[%c512, %c0_18] : memref<768x256xbf16, #tpu.memory_space<vmem>>, vector<256x256xbf16>
    tpu.vector_store %arg7[%c512, %c0_18], %34 {strides = array<i32>} : memref<768x256xbf16, #tpu.memory_space<vmem>>, vector<256x256xbf16>,
    %c0_19 = arith.constant 0 : index
    %c0_20 = arith.constant 0 : index
    %36 = vector.load %arg1[%c0_19, %c0_20] : memref<64x768xbf16, #tpu.memory_space<vmem>>, vector<64x768xbf16>
    %c0_21 = arith.constant 0 : index
    %c0_22 = arith.constant 0 : index
    %37 = vector.load %arg7[%c0_21, %c0_22] : memref<768x256xbf16, #tpu.memory_space<vmem>>, vector<768x256xbf16>
    %cst = arith.constant dense<0.000000e+00> : vector<64x256xf32>
    %38 = tpu.matmul %36, %37, %cst {dimension_numbers = #tpu.dot_dimension_numbers<[1], [0], [0], [1], [0, 0, 1, 1], [], []>} : vector<64x768xbf16>, vector<768x256xbf16>, vector<64x256xf32> -> vector<64x256xf32>
    %39 = vector.shape_cast %38 : vector<64x256xf32> to vector<2x32x256xf32>
    %c0_23 = arith.constant 0 : index
    %c0_24 = arith.constant 0 : index
    %40 = vector.load %arg4[%c0_23, %c0_24] : memref<32x256xf32, #tpu.memory_space<vmem>>, vector<32x256xf32>
    %41 = vector.shape_cast %40 : vector<32x256xf32> to vector<1x32x256xf32>
    %42 = vector.broadcast %41 : vector<1x32x256xf32> to vector<2x32x256xf32>
    %43 = arith.mulf %39, %42 : vector<2x32x256xf32>
    %cst_25 = arith.constant dense<0.000000e+00> : vector<2x256xf32>
    %44 = vector.multi_reduction <add>, %43, %cst_25 [1] : vector<2x32x256xf32> to vector<2x256xf32>
    %c0_26 = arith.constant 0 : index
    %c0_27 = arith.constant 0 : index
    %45 = vector.load %arg5[%c0_26, %c0_27] : memref<1x256xf32, #tpu.memory_space<vmem>>, vector<1x256xf32>
    %46 = vector.broadcast %45 : vector<1x256xf32> to vector<2x256xf32>
    %47 = arith.addf %44, %46 : vector<2x256xf32>
    %c0_28 = arith.constant 0 : index
    %c0_29 = arith.constant 0 : index
    %48 = vector.load %arg6[%c0_28, %c0_29] : memref<2x256xf32, #tpu.memory_space<vmem>>, vector<2x256xf32>
    tpu.vector_store %arg6[%c0_28, %c0_29], %47 {strides = array<i32>} : memref<2x256xf32, #tpu.memory_space<vmem>>, vector<2x256xf32>,
    return
  }
  func.func @transform_0(%arg0: i32) -> (i32, i32) {
    %c0_i32 = arith.constant 0 : i32
    %c0_i32_0 = arith.constant 0 : i32
    %c0_i32_1 = arith.constant 0 : i32
    return %c0_i32, %c0_i32_0 : i32, i32
  }
  func.func @transform_1(%arg0: i32) -> (i32, i32, i32) {
    %c0_i32 = arith.constant 0 : i32
    %c0_i32_0 = arith.constant 0 : i32
    %c0_i32_1 = arith.constant 0 : i32
    return %c0_i32, %c0_i32_0, %arg0 : i32, i32, i32
  }
  func.func @transform_2(%arg0: i32) -> (i32, i32, i32) {
    %c0_i32 = arith.constant 0 : i32
    %c0_i32_0 = arith.constant 0 : i32
    %c0_i32_1 = arith.constant 0 : i32
    return %c0_i32, %c0_i32_0, %arg0 : i32, i32, i32
  }
  func.func @transform_3(%arg0: i32) -> (i32, i32) {
    %c0_i32 = arith.constant 0 : i32
    %c0_i32_0 = arith.constant 0 : i32
    return %c0_i32, %arg0 : i32, i32
  }
  func.func @transform_4(%arg0: i32) -> (i32, i32) {
    %c0_i32 = arith.constant 0 : i32
    %c0_i32_0 = arith.constant 0 : i32
    return %c0_i32, %arg0 : i32, i32
  }
  func.func @transform_5(%arg0: i32) -> (i32, i32) {
    %c0_i32 = arith.constant 0 : i32
    %c0_i32_0 = arith.constant 0 : i32
    return %c0_i32, %arg0 : i32, i32
  }
}

</mosaic_0001>

<llo_original>
// kernel: tpu_custom_call.1
$region0: #{tpu_custom_call.1}
  #allocation0 [shape = 'u32[]', space=smem, size = 0x4, offset = 0x4, fixed_abs, tag = 'smem constant byte address 0x4 - core index']
  #allocation1 [shape = 'u32[144,128]{1,0:T(1,128)}', space=vmem, size = 0x12000, scoped, tag = 'internal scratch']
  #allocation2 [shape = 'bf16[768,256]{1,0:T(16,128)(2,1)}', space=vmem, size = 0x60000, scoped, tag = 'scratch operand']
  %s0 = inlined_call_operand.hbm [shape: bf16[64,768], index: 0, kind: input, shape index: {}]
  %s1 = inlined_call_operand.hbm [shape: f32[3,16,512], index: 1, kind: input, shape index: {}]
  %s2 = inlined_call_operand.hbm [shape: f32[3,16,512], index: 2, kind: input, shape index: {}]
  %s3 = inlined_call_operand.hbm [shape: f32[32,512], index: 3, kind: input, shape index: {}]
  %s4 = inlined_call_operand.vmem [shape: f32[1,512], index: 4, kind: input, shape index: {}]
  %s5 = inlined_call_operand.hbm [shape: f32[2,512], index: 5, kind: output, shape index: {}]
  %s6 = sld [smem:[#allocation0]]
  $region69: #{tpu_custom_call.1} parent=0
    _
  %s8 = ssub.s32 1, %s6
  %s9 = scalar_select 0, %s8, %s6
  $region1: #{tpu_custom_call.1} parent=0
    #allocation3 [shape = 'u8[98304]{0}', space=vmem, size = 0x18000, scoped, tag = 'input window, operand 0, single buffered']
    #allocation4 [shape = 's32[2]{0}', space=sflag, size = 0x8, scoped, tag = 'scoped memory for tpu_custom_call.1']
    #allocation5 [shape = 's32[2]{0}', space=sflag, size = 0x8, scoped, tag = 'scoped memory for tpu_custom_call.1']
    #allocation6 [shape = 'u8[98304]{0}', space=vmem, size = 0x18000, scoped, tag = 'input window, operand 1']
    #allocation7 [shape = 's32[2]{0}', space=sflag, size = 0x8, scoped, tag = 'scoped memory for tpu_custom_call.1']
    #allocation8 [shape = 'u8[98304]{0}', space=vmem, size = 0x18000, scoped, tag = 'input window, operand 2']
    #allocation9 [shape = 'u8[65536]{0}', space=vmem, size = 0x10000, scoped, tag = 'input window, operand 3']
    #allocation10 [shape = 's32[2]{0}', space=sflag, size = 0x8, scoped, tag = 'scoped memory for tpu_custom_call.1']
    #allocation11 [shape = 'u8[4096]{0}', space=vmem, size = 0x1000, scoped, tag = 'output window, operand 0']
    %10 = vsyncpa [#allocation4], 0
    %11 = vsyncpa [#allocation7], 0
    %s12 = scalar_lea.sflag [#allocation7], 1
    %13 = vsyncpa %s12, 0
    %14 = vsyncpa [#allocation10], 0
    %s15 = scalar_lea.sflag [#allocation10], 1
    %16 = vsyncpa %s15, 0
    %17 = vsyncpa [#allocation5], 0
    %s18 = scalar_lea.sflag [#allocation5], 1
    %19 = vsyncpa %s18, 0
    loop: start=0, step=1, limit=4
    $region2: #{tpu_custom_call.1} parent=1 // loop_pre_header
      _
    $region3: #{tpu_custom_call.1} parent=1 // loop_header
      %s21 = sphi 0, %s25
      %p22 = scmp.ge.s32.totalorder %s21, 4
      %s29 = sphi 0, %s29
      %s31 = sphi 0, %s29
      %s32 = sphi 0, %s31
      %s46 = sphi 0, %s32
      %s52 = sphi 0, %s54
      %s55 = sphi 0, %s52
      %s56 = sphi 0, %s55
      %s72 = sphi 0, %s56
      %s78 = sphi 0, %s80
      %s81 = sphi 0, %s78
      %s82 = sphi 0, %s81
      %s98 = sphi 0, %s82
      %s104 = sphi 0, %s106
      %s107 = sphi 0, %s104
      %s108 = sphi 0, %s107
      %s124 = sphi 0, %s108
      %s130 = sphi 0, %s132
      %s133 = sphi 0, %s130
      %s134 = sphi 0, %s133
      %s150 = sphi 0, %s134
      %s156 = sphi 0, %s158
      %s159 = sphi 0, %s156
      %s160 = sphi 0, %s159
      %s176 = sphi 0, %s160
    $region4: #{tpu_custom_call.1} parent=1 // loop_header_branch
      %24 = sbr.rel (%p22) target = $region8
    $region5: #{tpu_custom_call.1} parent=1 // loop_body
      %s26 = ssub.s32 %s21, 1
      %s27 = ssub.s32 %s21, 2
      %s28 = sadd.s32 %s21, 1
      %s30 = sadd.s32 %s29, 1
      %p33 = scmp.eq.s32.totalorder %s21, 1
      %p34 = scmp.ne.s32.totalorder %s29, %s31
      %p35 = scmp.eq.s32.totalorder %s21, 0
      %p36 = por %p34, %p35
      %p37 = scmp.ne.s32.totalorder %s29, %s31
      %p38 = scmp.eq.s32.totalorder %s26, 1
      %p39 = por %p37, %p38
      %p40 = scmp.ne.s32.totalorder %s31, %s32
      %p41 = scmp.eq.s32.totalorder %s26, 0
      %p42 = por %p40, %p41
      %p43 = scmp.ne.s32.totalorder %s31, %s32
      %p44 = scmp.eq.s32.totalorder %s27, 1
      %p45 = por %p43, %p44
      %p47 = scmp.ne.s32.totalorder %s32, %s46
      %p48 = scmp.eq.s32.totalorder %s27, 0
      %p49 = por %p47, %p48
      %s50 = ssub.s32 %s21, %s28
      %p51 = scmp.eq.s32.totalorder %s50, 0
      %s53 = sadd.s32 %s52, 1
      %s54 = scalar_select %p51, %s52, %s53
      %p57 = pneg %p51
      %p58 = scmp.eq.s32.totalorder %s21, 1
      %p59 = por %p57, %p58
      %p60 = scmp.ne.s32.totalorder %s52, %s55
      %p61 = scmp.eq.s32.totalorder %s21, 0
      %p62 = por %p60, %p61
      %p63 = scmp.ne.s32.totalorder %s52, %s55
      %p64 = scmp.eq.s32.totalorder %s26, 1
      %p65 = por %p63, %p64
      %p66 = scmp.ne.s32.totalorder %s55, %s56
      %p67 = scmp.eq.s32.totalorder %s26, 0
      %p68 = por %p66, %p67
      %p69 = scmp.ne.s32.totalorder %s55, %s56
      %p70 = scmp.eq.s32.totalorder %s27, 1
      %p71 = por %p69, %p70
      %p73 = scmp.ne.s32.totalorder %s56, %s72
      %p74 = scmp.eq.s32.totalorder %s27, 0
      %p75 = por %p73, %p74
      %s76 = ssub.s32 %s21, %s28
      %p77 = scmp.eq.s32.totalorder %s76, 0
      %s79 = sadd.s32 %s78, 1
      %s80 = scalar_select %p77, %s78, %s79
      %p83 = pneg %p77
      %p84 = scmp.eq.s32.totalorder %s21, 1
      %p85 = por %p83, %p84
      %p86 = scmp.ne.s32.totalorder %s78, %s81
      %p87 = scmp.eq.s32.totalorder %s21, 0
      %p88 = por %p86, %p87
      %p89 = scmp.ne.s32.totalorder %s78, %s81
      %p90 = scmp.eq.s32.totalorder %s26, 1
      %p91 = por %p89, %p90
      %p92 = scmp.ne.s32.totalorder %s81, %s82
      %p93 = scmp.eq.s32.totalorder %s26, 0
      %p94 = por %p92, %p93
      %p95 = scmp.ne.s32.totalorder %s81, %s82
      %p96 = scmp.eq.s32.totalorder %s27, 1
      %p97 = por %p95, %p96
      %p99 = scmp.ne.s32.totalorder %s82, %s98
      %p100 = scmp.eq.s32.totalorder %s27, 0
      %p101 = por %p99, %p100
      %s102 = ssub.s32 %s21, %s28
      %p103 = scmp.eq.s32.totalorder %s102, 0
      %s105 = sadd.s32 %s104, 1
      %s106 = scalar_select %p103, %s104, %s105
      %p109 = pneg %p103
      %p110 = scmp.eq.s32.totalorder %s21, 1
      %p111 = por %p109, %p110
      %p112 = scmp.ne.s32.totalorder %s104, %s107
      %p113 = scmp.eq.s32.totalorder %s21, 0
      %p114 = por %p112, %p113
      %p115 = scmp.ne.s32.totalorder %s104, %s107
      %p116 = scmp.eq.s32.totalorder %s26, 1
      %p117 = por %p115, %p116
      %p118 = scmp.ne.s32.totalorder %s107, %s108
      %p119 = scmp.eq.s32.totalorder %s26, 0
      %p120 = por %p118, %p119
      %p121 = scmp.ne.s32.totalorder %s107, %s108
      %p122 = scmp.eq.s32.totalorder %s27, 1
      %p123 = por %p121, %p122
      %p125 = scmp.ne.s32.totalorder %s108, %s124
      %p126 = scmp.eq.s32.totalorder %s27, 0
      %p127 = por %p125, %p126
      %s128 = ssub.s32 %s21, %s28
      %p129 = scmp.eq.s32.totalorder %s128, 0
      %s131 = sadd.s32 %s130, 1
      %s132 = scalar_select %p129, %s130, %s131
      %p135 = pneg %p129
      %p136 = scmp.eq.s32.totalorder %s21, 1
      %p137 = por %p135, %p136
      %p138 = scmp.ne.s32.totalorder %s130, %s133
      %p139 = scmp.eq.s32.totalorder %s21, 0
      %p140 = por %p138, %p139
      %p141 = scmp.ne.s32.totalorder %s130, %s133
      %p142 = scmp.eq.s32.totalorder %s26, 1
      %p143 = por %p141, %p142
      %p144 = scmp.ne.s32.totalorder %s133, %s134
      %p145 = scmp.eq.s32.totalorder %s26, 0
      %p146 = por %p144, %p145
      %p147 = scmp.ne.s32.totalorder %s133, %s134
      %p148 = scmp.eq.s32.totalorder %s27, 1
      %p149 = por %p147, %p148
      %p151 = scmp.ne.s32.totalorder %s134, %s150
      %p152 = scmp.eq.s32.totalorder %s27, 0
      %p153 = por %p151, %p152
      %s154 = ssub.s32 %s21, %s28
      %p155 = scmp.eq.s32.totalorder %s154, 0
      %s157 = sadd.s32 %s156, 1
      %s158 = scalar_select %p155, %s156, %s157
      %p161 = pneg %p155
      %p162 = scmp.eq.s32.totalorder %s21, 1
      %p163 = por %p161, %p162
      %p164 = scmp.ne.s32.totalorder %s156, %s159
      %p165 = scmp.eq.s32.totalorder %s21, 0
      %p166 = por %p164, %p165
      %p167 = scmp.ne.s32.totalorder %s156, %s159
      %p168 = scmp.eq.s32.totalorder %s26, 1
      %p169 = por %p167, %p168
      %p170 = scmp.ne.s32.totalorder %s159, %s160
      %p171 = scmp.eq.s32.totalorder %s26, 0
      %p172 = por %p170, %p171
      %p173 = scmp.ne.s32.totalorder %s159, %s160
      %p174 = scmp.eq.s32.totalorder %s27, 1
      %p175 = por %p173, %p174
      %p177 = scmp.ne.s32.totalorder %s160, %s176
      %p178 = scmp.eq.s32.totalorder %s27, 0
      %p179 = por %p177, %p178
      %p180 = scmp.le.s32.totalorder 1, %s21
      %p181 = scmp.lt.s32.totalorder %s21, 3
      %p182 = pnand %p180, %p181
      %p183 = pneg %p182
      // Predicated region
      $region9: #{tpu_custom_call.1} parent=5 // pred_check
        _
      $region10: #{tpu_custom_call.1} parent=5 // pred_check_branch
        %185 = sbr.rel (%p182) target = $region12
      $region11: #{tpu_custom_call.1} parent=5 // pred_region
        %s186 = ssub.s32 %s21, 1
        // Predicated region
        $region13: #{tpu_custom_call.1} parent=11 // pred_check
          %p187 = pneg %p42
        $region14: #{tpu_custom_call.1} parent=11 // pred_check_branch
          %189 = sbr.rel (%p187) target = $region16
        $region15: #{tpu_custom_call.1} parent=11 // pred_region
          %s191 = ssub.s32 3072, 3072
          %192 = vsyncadd [#allocation4], %s191
          %s193 = sshll.u32 [#allocation3], 4
          %s194 = int_to_ptr.vmem [resolvable:$true] %s193
          %199 = dma.hbm_to_vmem [thread:$0]  %s0, 3072, %s194, [#allocation4], 384, 384, 24
        $region16: #{tpu_custom_call.1} parent=11 // pred_fallthru
          _
      $region12: #{tpu_custom_call.1} parent=5 // pred_fallthru
        _
      %p200 = scmp.lt.s32.totalorder %s21, 2
      // Predicated region
      $region17: #{tpu_custom_call.1} parent=5 // pred_check
        %p201 = pneg %p200
      $region18: #{tpu_custom_call.1} parent=5 // pred_check_branch
        %203 = sbr.rel (%p201) target = $region20
      $region19: #{tpu_custom_call.1} parent=5 // pred_region
        // Predicated region
        $region21: #{tpu_custom_call.1} parent=19 // pred_check
          %p204 = pneg %p62
        $region22: #{tpu_custom_call.1} parent=19 // pred_check_branch
          %206 = sbr.rel (%p204) target = $region24
        $region23: #{tpu_custom_call.1} parent=19 // pred_region
          %s207 = sand.u32 %s21, 1
          %s208 = scalar_lea.sflag [#allocation7], %s207
          %s209 = sand.u32 %s52, 1
          %s210 = smul.addr %s209, 96
          %s211 = scalar_lea.vmem [#allocation6], %s210
          %s212 = smul.u32 2, %s21
          %s214 = ssub.s32 1536, 1536
          %215 = vsyncadd %s208, %s214
          %s216 = smul.addr %s212, 128
          %s217 = scalar_lea.hbm %s1, %s216
          %s218 = sshll.u32 %s211, 4
          %s219 = int_to_ptr.vmem [resolvable:$true] %s218
          %224 = dma.hbm_to_vmem [thread:$0]  %s217, 1536, %s219, %s208, 512, 256, 16
        $region24: #{tpu_custom_call.1} parent=19 // pred_fallthru
          _
        // Predicated region
        $region25: #{tpu_custom_call.1} parent=19 // pred_check
          %p225 = pneg %p88
        $region26: #{tpu_custom_call.1} parent=19 // pred_check_branch
          %227 = sbr.rel (%p225) target = $region28
        $region27: #{tpu_custom_call.1} parent=19 // pred_region
          %s228 = sand.u32 %s21, 1
          %s229 = scalar_lea.sflag [#allocation7], %s228
          %s230 = sand.u32 %s78, 1
          %s231 = smul.addr %s230, 96
          %s232 = scalar_lea.vmem [#allocation8], %s231
          %s233 = smul.u32 2, %s21
          %s235 = ssub.s32 1536, 1536
          %236 = vsyncadd %s229, %s235
          %s237 = smul.addr %s233, 128
          %s238 = scalar_lea.hbm %s2, %s237
          %s239 = sshll.u32 %s232, 4
          %s240 = int_to_ptr.vmem [resolvable:$true] %s239
          %245 = dma.hbm_to_vmem [thread:$0]  %s238, 1536, %s240, %s229, 512, 256, 16
        $region28: #{tpu_custom_call.1} parent=19 // pred_fallthru
          _
        // Predicated region
        $region29: #{tpu_custom_call.1} parent=19 // pred_check
          %p246 = pneg %p114
        $region30: #{tpu_custom_call.1} parent=19 // pred_check_branch
          %248 = sbr.rel (%p246) target = $region32
        $region31: #{tpu_custom_call.1} parent=19 // pred_region
          %s249 = sand.u32 %s104, 1
          %s250 = scalar_lea.sflag [#allocation10], %s249
          %s251 = sand.u32 %s104, 1
          %s252 = smul.addr %s251, 64
          %s253 = scalar_lea.vmem [#allocation9], %s252
          %s254 = smul.u32 2, %s21
          %s256 = ssub.s32 1024, 1024
          %257 = vsyncadd %s250, %s256
          %s258 = smul.addr %s254, 128
          %s259 = scalar_lea.hbm %s3, %s258
          %s260 = sshll.u32 %s253, 4
          %s261 = int_to_ptr.vmem [resolvable:$true] %s260
          %266 = dma.hbm_to_vmem [thread:$0]  %s259, 1024, %s261, %s250, 512, 256, 16
        $region32: #{tpu_custom_call.1} parent=19 // pred_fallthru
          _
        // Predicated region
        $region33: #{tpu_custom_call.1} parent=19 // pred_check
          %p267 = pneg %p140
        $region34: #{tpu_custom_call.1} parent=19 // pred_check_branch
          %269 = sbr.rel (%p267) target = $region36
        $region35: #{tpu_custom_call.1} parent=19 // pred_region
          %s270 = smul.u32 2, %s21
          %p271 = scmp.lt.s32.totalorder %s270, 3
          %s272 = scalar_select %p271, %s270, 3
          %s273 = scalar_lea.vmem %s4, %s272
          %s274 = smul.u32 2, %s21
        $region36: #{tpu_custom_call.1} parent=19 // pred_fallthru
          _
      $region20: #{tpu_custom_call.1} parent=5 // pred_fallthru
        _
      %p275 = scmp.le.s32.totalorder 1, %s21
      %p276 = scmp.lt.s32.totalorder %s21, 3
      %p277 = pnand %p275, %p276
      %p278 = pneg %p277
      // Predicated region
      $region37: #{tpu_custom_call.1} parent=5 // pred_check
        _
      $region38: #{tpu_custom_call.1} parent=5 // pred_check_branch
        %280 = sbr.rel (%p277) target = $region40
      $region39: #{tpu_custom_call.1} parent=5 // pred_region
        %s281 = ssub.s32 %s21, 1
        // Predicated region
        $region41: #{tpu_custom_call.1} parent=39 // pred_check
          %p282 = pneg %p42
        $region42: #{tpu_custom_call.1} parent=39 // pred_check_branch
          %284 = sbr.rel (%p282) target = $region44
        $region43: #{tpu_custom_call.1} parent=39 // pred_region
          %285 = dma.done [#allocation4], 3072
        $region44: #{tpu_custom_call.1} parent=39 // pred_fallthru
          _
        %s286 = sand.u32 %s26, 1
        %s287 = scalar_lea.sflag [#allocation7], %s286
        %s288 = sand.u32 %s55, 1
        %s289 = smul.addr %s288, 96
        %s290 = scalar_lea.vmem [#allocation6], %s289
        // Predicated region
        $region45: #{tpu_custom_call.1} parent=39 // pred_check
          %p291 = pneg %p68
        $region46: #{tpu_custom_call.1} parent=39 // pred_check_branch
          %293 = sbr.rel (%p291) target = $region48
        $region47: #{tpu_custom_call.1} parent=39 // pred_region
          %294 = dma.done %s287, 1536
        $region48: #{tpu_custom_call.1} parent=39 // pred_fallthru
          _
        %s295 = sand.u32 %s26, 1
        %s296 = scalar_lea.sflag [#allocation7], %s295
        %s297 = sand.u32 %s81, 1
        %s298 = smul.addr %s297, 96
        %s299 = scalar_lea.vmem [#allocation8], %s298
        // Predicated region
        $region49: #{tpu_custom_call.1} parent=39 // pred_check
          %p300 = pneg %p94
        $region50: #{tpu_custom_call.1} parent=39 // pred_check_branch
          %302 = sbr.rel (%p300) target = $region52
        $region51: #{tpu_custom_call.1} parent=39 // pred_region
          %303 = dma.done %s296, 1536
        $region52: #{tpu_custom_call.1} parent=39 // pred_fallthru
          _
        %s304 = sand.u32 %s107, 1
        %s305 = scalar_lea.sflag [#allocation10], %s304
        %s306 = sand.u32 %s107, 1
        %s307 = smul.addr %s306, 64
        %s308 = scalar_lea.vmem [#allocation9], %s307
        // Predicated region
        $region53: #{tpu_custom_call.1} parent=39 // pred_check
          %p309 = pneg %p120
        $region54: #{tpu_custom_call.1} parent=39 // pred_check_branch
          %311 = sbr.rel (%p309) target = $region56
        $region55: #{tpu_custom_call.1} parent=39 // pred_region
          %312 = dma.done %s305, 1024
        $region56: #{tpu_custom_call.1} parent=39 // pred_fallthru
          _
        %p313 = pneg %p42
        %p314 = pneg %p39
        %s315 = sand.u32 %s26, 1
        %s316 = scalar_lea.sflag [#allocation7], %s315
        %s317 = sand.u32 %s55, 1
        %s318 = smul.addr %s317, 96
        %s319 = scalar_lea.vmem [#allocation6], %s318
        %p320 = pneg %p68
        %p321 = pneg %p65
        %s322 = sand.u32 %s26, 1
        %s323 = scalar_lea.sflag [#allocation7], %s322
        %s324 = sand.u32 %s81, 1
        %s325 = smul.addr %s324, 96
        %s326 = scalar_lea.vmem [#allocation8], %s325
        %p327 = pneg %p94
        %p328 = pneg %p91
        %s329 = sand.u32 %s107, 1
        %s330 = scalar_lea.sflag [#allocation10], %s329
        %s331 = sand.u32 %s107, 1
        %s332 = smul.addr %s331, 64
        %s333 = scalar_lea.vmem [#allocation9], %s332
        %p334 = pneg %p120
        %p335 = pneg %p117
        %s336 = smul.u32 2, %s26
        %p337 = scmp.lt.s32.totalorder %s336, 3
        %s338 = scalar_select %p337, %s336, 3
        %s339 = scalar_lea.vmem %s4, %s338
        %p340 = pneg %p146
        %p341 = pneg %p143
        %p342 = pneg %p172
        %p343 = pneg %p169
        %s344 = sand.u32 %s159, 1
        %s345 = scalar_lea.sflag [#allocation5], %s344
        %s346 = sand.u32 %s159, 1
        %s347 = smul.addr %s346, 4
        %s348 = scalar_lea.vmem [#allocation11], %s347
        %s349 = smul.u32 2, %s26
        %s350 = smul.u32 2, %s26
        %s351 = smul.u32 2, %s26
        %s352 = smul.u32 2, %s26
        %p353 = scmp.lt.s32.totalorder %s352, 3
        %s354 = scalar_select %p353, %s352, 3
        %s355 = scalar_lea.vmem %s4, %s354
        %s356 = smul.u32 2, %s26
        %s357 = smul.u32 2, %s26
        %v358 = vld [vmem:[%s299] sm:$0xff]
        %v359 = vld [vmem:[%s299 + $0x8] sm:$0xff]
        %v360 = vld [vmem:[%s299 + $0x10] sm:$0xff]
        %v361 = vld [vmem:[%s299 + $0x18] sm:$0xff]
        %v366 = vcombine.low %v358, %v359
        %v367 = vcombine.high %v358, %v359
        %v369 = vunpack.c.l.s4 1966171168
        %v370 = vunpack.c.0.s8 %v369
        %v371 = vlaneseq
        %v372 = vshrl.u32 %v371, 7
        %v373 = vsub.s32 %v370, %v372
        %v374 = vrot.slane %v366, %v373
        %v376 = vunpack.c.l.s4 1966171168
        %v377 = vunpack.c.0.s8 %v376
        %v378 = vlaneseq
        %v379 = vshrl.u32 %v378, 7
        %v380 = vsub.s32 %v377, %v379
        %v381 = vrot.slane %v367, %v380
        %v382 = vcombine.high %v374, %v374
        %v383 = vcombine.high %v381, %v381
        %v385 = vunpack.c.l.s4 1966171168
        %v386 = vunpack.c.0.s8 %v385
        %v387 = vlaneseq
        %v388 = vshrl.u32 %v387, 7
        %v389 = vsub.s32 %v386, %v388
        %v390 = vrot.slane %v374, %v389
        %v392 = vunpack.c.l.s4 1966171168
        %v393 = vunpack.c.0.s8 %v392
        %v394 = vlaneseq
        %v395 = vshrl.u32 %v394, 7
        %v396 = vsub.s32 %v393, %v395
        %v397 = vrot.slane %v381, %v396
        %v399 = vunpack.c.l.s4 1966171168
        %v400 = vunpack.c.0.s8 %v399
        %v401 = vlaneseq
        %v402 = vshrl.u32 %v401, 7
        %v403 = vsub.s32 %v400, %v402
        %v404 = vrot.slane %v382, %v403
        %v406 = vunpack.c.l.s4 1966171168
        %v407 = vunpack.c.0.s8 %v406
        %v408 = vlaneseq
        %v409 = vshrl.u32 %v408, 7
        %v410 = vsub.s32 %v407, %v409
        %v411 = vrot.slane %v383, %v410
        %v412 = vcombine.high %v390, %v390
        %v413 = vcombine.high %v397, %v397
        %v414 = vcombine.high %v404, %v404
        %v415 = vcombine.high %v411, %v411
        %v416 = vcombine.low %v360, %v361
        %v417 = vcombine.high %v360, %v361
        %v419 = vunpack.c.l.s4 1966171168
        %v420 = vunpack.c.0.s8 %v419
        %v421 = vlaneseq
        %v422 = vshrl.u32 %v421, 7
        %v423 = vsub.s32 %v420, %v422
        %v424 = vrot.slane %v416, %v423
        %v426 = vunpack.c.l.s4 1966171168
        %v427 = vunpack.c.0.s8 %v426
        %v428 = vlaneseq
        %v429 = vshrl.u32 %v428, 7
        %v430 = vsub.s32 %v427, %v429
        %v431 = vrot.slane %v417, %v430
        %v432 = vcombine.high %v424, %v424
        %v433 = vcombine.high %v431, %v431
        %v435 = vunpack.c.l.s4 1966171168
        %v436 = vunpack.c.0.s8 %v435
        %v437 = vlaneseq
        %v438 = vshrl.u32 %v437, 7
        %v439 = vsub.s32 %v436, %v438
        %v440 = vrot.slane %v424, %v439
        %v442 = vunpack.c.l.s4 1966171168
        %v443 = vunpack.c.0.s8 %v442
        %v444 = vlaneseq
        %v445 = vshrl.u32 %v444, 7
        %v446 = vsub.s32 %v443, %v445
        %v447 = vrot.slane %v431, %v446
        %v449 = vunpack.c.l.s4 1966171168
        %v450 = vunpack.c.0.s8 %v449
        %v451 = vlaneseq
        %v452 = vshrl.u32 %v451, 7
        %v453 = vsub.s32 %v450, %v452
        %v454 = vrot.slane %v432, %v453
        %v456 = vunpack.c.l.s4 1966171168
        %v457 = vunpack.c.0.s8 %v456
        %v458 = vlaneseq
        %v459 = vshrl.u32 %v458, 7
        %v460 = vsub.s32 %v457, %v459
        %v461 = vrot.slane %v433, %v460
        %v462 = vcombine.high %v440, %v440
        %v463 = vcombine.high %v447, %v447
        %v464 = vcombine.high %v454, %v454
        %v465 = vcombine.high %v461, %v461
        %v466 = vld [vmem:[%s290] sm:$0xff]
        %v467 = vld [vmem:[%s290 + $0x8] sm:$0xff]
        %v468 = vld [vmem:[%s290 + $0x10] sm:$0xff]
        %v469 = vld [vmem:[%s290 + $0x18] sm:$0xff]
        %v470 = vlaneseq
        %v471 = vshrl.u32 %v470, 7
        %v472 = vsub.s32 0, %v471
        %v473 = vrot.slane %v390, %v472
        %v474 = vlaneseq
        %v475 = vshrl.u32 %v474, 7
        %v476 = vsub.s32 1, %v475
        %v477 = vrot.slane %v390, %v476
        %v478 = vlaneseq
        %v479 = vshrl.u32 %v478, 7
        %v480 = vsub.s32 0, %v479
        %v481 = vrot.slane %v404, %v480
        %v482 = vlaneseq
        %v483 = vshrl.u32 %v482, 7
        %v484 = vsub.s32 1, %v483
        %v485 = vrot.slane %v404, %v484
        %v486 = vlaneseq
        %v487 = vshrl.u32 %v486, 7
        %v488 = vsub.s32 0, %v487
        %v489 = vrot.slane %v412, %v488
        %v490 = vlaneseq
        %v491 = vshrl.u32 %v490, 7
        %v492 = vsub.s32 1, %v491
        %v493 = vrot.slane %v412, %v492
        %v494 = vlaneseq
        %v495 = vshrl.u32 %v494, 7
        %v496 = vsub.s32 0, %v495
        %v497 = vrot.slane %v414, %v496
        %v498 = vlaneseq
        %v499 = vshrl.u32 %v498, 7
        %v500 = vsub.s32 1, %v499
        %v501 = vrot.slane %v414, %v500
        %v502 = vlaneseq
        %v503 = vshrl.u32 %v502, 7
        %v504 = vsub.s32 0, %v503
        %v505 = vrot.slane %v397, %v504
        %v506 = vlaneseq
        %v507 = vshrl.u32 %v506, 7
        %v508 = vsub.s32 1, %v507
        %v509 = vrot.slane %v397, %v508
        %v510 = vlaneseq
        %v511 = vshrl.u32 %v510, 7
        %v512 = vsub.s32 0, %v511
        %v513 = vrot.slane %v411, %v512
        %v514 = vlaneseq
        %v515 = vshrl.u32 %v514, 7
        %v516 = vsub.s32 1, %v515
        %v517 = vrot.slane %v411, %v516
        %v518 = vlaneseq
        %v519 = vshrl.u32 %v518, 7
        %v520 = vsub.s32 0, %v519
        %v521 = vrot.slane %v413, %v520
        %v522 = vlaneseq
        %v523 = vshrl.u32 %v522, 7
        %v524 = vsub.s32 1, %v523
        %v525 = vrot.slane %v413, %v524
        %v526 = vlaneseq
        %v527 = vshrl.u32 %v526, 7
        %v528 = vsub.s32 0, %v527
        %v529 = vrot.slane %v415, %v528
        %v530 = vlaneseq
        %v531 = vshrl.u32 %v530, 7
        %v532 = vsub.s32 1, %v531
        %v533 = vrot.slane %v415, %v532
        %v534 = vlaneseq
        %v535 = vshrl.u32 %v534, 7
        %v536 = vsub.s32 0, %v535
        %v537 = vrot.slane %v440, %v536
        %v538 = vlaneseq
        %v539 = vshrl.u32 %v538, 7
        %v540 = vsub.s32 1, %v539
        %v541 = vrot.slane %v440, %v540
        %v542 = vlaneseq
        %v543 = vshrl.u32 %v542, 7
        %v544 = vsub.s32 0, %v543
        %v545 = vrot.slane %v454, %v544
        %v546 = vlaneseq
        %v547 = vshrl.u32 %v546, 7
        %v548 = vsub.s32 1, %v547
        %v549 = vrot.slane %v454, %v548
        %v550 = vlaneseq
        %v551 = vshrl.u32 %v550, 7
        %v552 = vsub.s32 0, %v551
        %v553 = vrot.slane %v462, %v552
        %v554 = vlaneseq
        %v555 = vshrl.u32 %v554, 7
        %v556 = vsub.s32 1, %v555
        %v557 = vrot.slane %v462, %v556
        %v558 = vlaneseq
        %v559 = vshrl.u32 %v558, 7
        %v560 = vsub.s32 0, %v559
        %v561 = vrot.slane %v464, %v560
        %v562 = vlaneseq
        %v563 = vshrl.u32 %v562, 7
        %v564 = vsub.s32 1, %v563
        %v565 = vrot.slane %v464, %v564
        %v566 = vlaneseq
        %v567 = vshrl.u32 %v566, 7
        %v568 = vsub.s32 0, %v567
        %v569 = vrot.slane %v447, %v568
        %v570 = vlaneseq
        %v571 = vshrl.u32 %v570, 7
        %v572 = vsub.s32 1, %v571
        %v573 = vrot.slane %v447, %v572
        %v574 = vlaneseq
        %v575 = vshrl.u32 %v574, 7
        %v576 = vsub.s32 0, %v575
        %v577 = vrot.slane %v461, %v576
        %v578 = vlaneseq
        %v579 = vshrl.u32 %v578, 7
        %v580 = vsub.s32 1, %v579
        %v581 = vrot.slane %v461, %v580
        %v582 = vlaneseq
        %v583 = vshrl.u32 %v582, 7
        %v584 = vsub.s32 0, %v583
        %v585 = vrot.slane %v463, %v584
        %v586 = vlaneseq
        %v587 = vshrl.u32 %v586, 7
        %v588 = vsub.s32 1, %v587
        %v589 = vrot.slane %v463, %v588
        %v590 = vlaneseq
        %v591 = vshrl.u32 %v590, 7
        %v592 = vsub.s32 0, %v591
        %v593 = vrot.slane %v465, %v592
        %v594 = vlaneseq
        %v595 = vshrl.u32 %v594, 7
        %v596 = vsub.s32 1, %v595
        %v597 = vrot.slane %v465, %v596
        %v630 = vmul.f32 %v473, %v466
        %v631 = vmul.f32 %v477, %v467
        %v632 = vmul.f32 %v473, %v468
        %v633 = vmul.f32 %v477, %v469
        %v634 = vmul.f32 %v481, %v466
        %v635 = vmul.f32 %v485, %v467
        %v636 = vmul.f32 %v481, %v468
        %v637 = vmul.f32 %v485, %v469
        %v638 = vmul.f32 %v489, %v466
        %v639 = vmul.f32 %v493, %v467
        %v640 = vmul.f32 %v489, %v468
        %v641 = vmul.f32 %v493, %v469
        %v642 = vmul.f32 %v497, %v466
        %v643 = vmul.f32 %v501, %v467
        %v644 = vmul.f32 %v497, %v468
        %v645 = vmul.f32 %v501, %v469
        %v646 = vmul.f32 %v505, %v466
        %v647 = vmul.f32 %v509, %v467
        %v648 = vmul.f32 %v505, %v468
        %v649 = vmul.f32 %v509, %v469
        %v650 = vmul.f32 %v513, %v466
        %v651 = vmul.f32 %v517, %v467
        %v652 = vmul.f32 %v513, %v468
        %v653 = vmul.f32 %v517, %v469
        %v654 = vmul.f32 %v521, %v466
        %v655 = vmul.f32 %v525, %v467
        %v656 = vmul.f32 %v521, %v468
        %v657 = vmul.f32 %v525, %v469
        %v658 = vmul.f32 %v529, %v466
        %v659 = vmul.f32 %v533, %v467
        %v660 = vmul.f32 %v529, %v468
        %v661 = vmul.f32 %v533, %v469
        %v662 = vmul.f32 %v537, %v466
        %v663 = vmul.f32 %v541, %v467
        %v664 = vmul.f32 %v537, %v468
        %v665 = vmul.f32 %v541, %v469
        %v666 = vmul.f32 %v545, %v466
        %v667 = vmul.f32 %v549, %v467
        %v668 = vmul.f32 %v545, %v468
        %v669 = vmul.f32 %v549, %v469
        %v670 = vmul.f32 %v553, %v466
        %v671 = vmul.f32 %v557, %v467
        %v672 = vmul.f32 %v553, %v468
        %v673 = vmul.f32 %v557, %v469
        %v674 = vmul.f32 %v561, %v466
        %v675 = vmul.f32 %v565, %v467
        %v676 = vmul.f32 %v561, %v468
        %v677 = vmul.f32 %v565, %v469
        %v678 = vmul.f32 %v569, %v466
        %v679 = vmul.f32 %v573, %v467
        %v680 = vmul.f32 %v569, %v468
        %v681 = vmul.f32 %v573, %v469
        %v682 = vmul.f32 %v577, %v466
        %v683 = vmul.f32 %v581, %v467
        %v684 = vmul.f32 %v577, %v468
        %v685 = vmul.f32 %v581, %v469
        %v686 = vmul.f32 %v585, %v466
        %v687 = vmul.f32 %v589, %v467
        %v688 = vmul.f32 %v585, %v468
        %v689 = vmul.f32 %v589, %v469
        %v690 = vmul.f32 %v593, %v466
        %v691 = vmul.f32 %v597, %v467
        %v692 = vmul.f32 %v593, %v468
        %v693 = vmul.f32 %v597, %v469
        %v694 = vpack.c.bf16 %v632, %v630
        %v695 = vpack.c.bf16 %v633, %v631
        %v696 = vpack.c.bf16 %v636, %v634
        %v697 = vpack.c.bf16 %v637, %v635
        %v698 = vpack.c.bf16 %v640, %v638
        %v699 = vpack.c.bf16 %v641, %v639
        %v700 = vpack.c.bf16 %v644, %v642
        %v701 = vpack.c.bf16 %v645, %v643
        %v702 = vpack.c.bf16 %v648, %v646
        %v703 = vpack.c.bf16 %v649, %v647
        %v704 = vpack.c.bf16 %v652, %v650
        %v705 = vpack.c.bf16 %v653, %v651
        %v706 = vpack.c.bf16 %v656, %v654
        %v707 = vpack.c.bf16 %v657, %v655
        %v708 = vpack.c.bf16 %v660, %v658
        %v709 = vpack.c.bf16 %v661, %v659
        %v710 = vpack.c.bf16 %v664, %v662
        %v711 = vpack.c.bf16 %v665, %v663
        %v712 = vpack.c.bf16 %v668, %v666
        %v713 = vpack.c.bf16 %v669, %v667
        %v714 = vpack.c.bf16 %v672, %v670
        %v715 = vpack.c.bf16 %v673, %v671
        %v716 = vpack.c.bf16 %v676, %v674
        %v717 = vpack.c.bf16 %v677, %v675
        %v718 = vpack.c.bf16 %v680, %v678
        %v719 = vpack.c.bf16 %v681, %v679
        %v720 = vpack.c.bf16 %v684, %v682
        %v721 = vpack.c.bf16 %v685, %v683
        %v722 = vpack.c.bf16 %v688, %v686
        %v723 = vpack.c.bf16 %v689, %v687
        %v724 = vpack.c.bf16 %v692, %v690
        %v725 = vpack.c.bf16 %v693, %v691
        %726 = vst [vmem:[#allocation2] sm:$0xff] %v694
        %727 = vst [vmem:[#allocation2 + $0x8] sm:$0xff] %v695
        %728 = vst [vmem:[#allocation2 + $0x10] sm:$0xff] %v696
        %729 = vst [vmem:[#allocation2 + $0x18] sm:$0xff] %v697
        %730 = vst [vmem:[#allocation2 + $0x20] sm:$0xff] %v698
        %731 = vst [vmem:[#allocation2 + $0x28] sm:$0xff] %v699
        %732 = vst [vmem:[#allocation2 + $0x30] sm:$0xff] %v700
        %733 = vst [vmem:[#allocation2 + $0x38] sm:$0xff] %v701
        %734 = vst [vmem:[#allocation2 + $0x40] sm:$0xff] %v702
        %735 = vst [vmem:[#allocation2 + $0x48] sm:$0xff] %v703
        %736 = vst [vmem:[#allocation2 + $0x50] sm:$0xff] %v704
        %737 = vst [vmem:[#allocation2 + $0x58] sm:$0xff] %v705
        %738 = vst [vmem:[#allocation2 + $0x60] sm:$0xff] %v706
        %739 = vst [vmem:[#allocation2 + $0x68] sm:$0xff] %v707
        %740 = vst [vmem:[#allocation2 + $0x70] sm:$0xff] %v708
        %741 = vst [vmem:[#allocation2 + $0x78] sm:$0xff] %v709
        %742 = vst [vmem:[#allocation2 + $0x80] sm:$0xff] %v710
        %743 = vst [vmem:[#allocation2 + $0x88] sm:$0xff] %v711
        %744 = vst [vmem:[#allocation2 + $0x90] sm:$0xff] %v712
        %745 = vst [vmem:[#allocation2 + $0x98] sm:$0xff] %v713
        %746 = vst [vmem:[#allocation2 + $0xa0] sm:$0xff] %v714
        %747 = vst [vmem:[#allocation2 + $0xa8] sm:$0xff] %v715
        %748 = vst [vmem:[#allocation2 + $0xb0] sm:$0xff] %v716
        %749 = vst [vmem:[#allocation2 + $0xb8] sm:$0xff] %v717
        %750 = vst [vmem:[#allocation2 + $0xc0] sm:$0xff] %v718
        %751 = vst [vmem:[#allocation2 + $0xc8] sm:$0xff] %v719
        %752 = vst [vmem:[#allocation2 + $0xd0] sm:$0xff] %v720
        %753 = vst [vmem:[#allocation2 + $0xd8] sm:$0xff] %v721
        %754 = vst [vmem:[#allocation2 + $0xe0] sm:$0xff] %v722
        %755 = vst [vmem:[#allocation2 + $0xe8] sm:$0xff] %v723
        %756 = vst [vmem:[#allocation2 + $0xf0] sm:$0xff] %v724
        %757 = vst [vmem:[#allocation2 + $0xf8] sm:$0xff] %v725
        %s758 = scalar_lea.vmem %s299, 32 [#allocation8]
        %v759 = vld [vmem:[%s758] sm:$0xff]
        %v760 = vld [vmem:[%s758 + $0x8] sm:$0xff]
        %v761 = vld [vmem:[%s758 + $0x10] sm:$0xff]
        %v762 = vld [vmem:[%s758 + $0x18] sm:$0xff]
        %v767 = vcombine.low %v759, %v760
        %v768 = vcombine.high %v759, %v760
        %v770 = vunpack.c.l.s4 1966171168
        %v771 = vunpack.c.0.s8 %v770
        %v772 = vlaneseq
        %v773 = vshrl.u32 %v772, 7
        %v774 = vsub.s32 %v771, %v773
        %v775 = vrot.slane %v767, %v774
        %v777 = vunpack.c.l.s4 1966171168
        %v778 = vunpack.c.0.s8 %v777
        %v779 = vlaneseq
        %v780 = vshrl.u32 %v779, 7
        %v781 = vsub.s32 %v778, %v780
        %v782 = vrot.slane %v768, %v781
        %v783 = vcombine.high %v775, %v775
        %v784 = vcombine.high %v782, %v782
        %v786 = vunpack.c.l.s4 1966171168
        %v787 = vunpack.c.0.s8 %v786
        %v788 = vlaneseq
        %v789 = vshrl.u32 %v788, 7
        %v790 = vsub.s32 %v787, %v789
        %v791 = vrot.slane %v775, %v790
        %v793 = vunpack.c.l.s4 1966171168
        %v794 = vunpack.c.0.s8 %v793
        %v795 = vlaneseq
        %v796 = vshrl.u32 %v795, 7
        %v797 = vsub.s32 %v794, %v796
        %v798 = vrot.slane %v782, %v797
        %v800 = vunpack.c.l.s4 1966171168
        %v801 = vunpack.c.0.s8 %v800
        %v802 = vlaneseq
        %v803 = vshrl.u32 %v802, 7
        %v804 = vsub.s32 %v801, %v803
        %v805 = vrot.slane %v783, %v804
        %v807 = vunpack.c.l.s4 1966171168
        %v808 = vunpack.c.0.s8 %v807
        %v809 = vlaneseq
        %v810 = vshrl.u32 %v809, 7
        %v811 = vsub.s32 %v808, %v810
        %v812 = vrot.slane %v784, %v811
        %v813 = vcombine.high %v791, %v791
        %v814 = vcombine.high %v798, %v798
        %v815 = vcombine.high %v805, %v805
        %v816 = vcombine.high %v812, %v812
        %v817 = vcombine.low %v761, %v762
        %v818 = vcombine.high %v761, %v762
        %v820 = vunpack.c.l.s4 1966171168
        %v821 = vunpack.c.0.s8 %v820
        %v822 = vlaneseq
        %v823 = vshrl.u32 %v822, 7
        %v824 = vsub.s32 %v821, %v823
        %v825 = vrot.slane %v817, %v824
        %v827 = vunpack.c.l.s4 1966171168
        %v828 = vunpack.c.0.s8 %v827
        %v829 = vlaneseq
        %v830 = vshrl.u32 %v829, 7
        %v831 = vsub.s32 %v828, %v830
        %v832 = vrot.slane %v818, %v831
        %v833 = vcombine.high %v825, %v825
        %v834 = vcombine.high %v832, %v832
        %v836 = vunpack.c.l.s4 1966171168
        %v837 = vunpack.c.0.s8 %v836
        %v838 = vlaneseq
        %v839 = vshrl.u32 %v838, 7
        %v840 = vsub.s32 %v837, %v839
        %v841 = vrot.slane %v825, %v840
        %v843 = vunpack.c.l.s4 1966171168
        %v844 = vunpack.c.0.s8 %v843
        %v845 = vlaneseq
        %v846 = vshrl.u32 %v845, 7
        %v847 = vsub.s32 %v844, %v846
        %v848 = vrot.slane %v832, %v847
        %v850 = vunpack.c.l.s4 1966171168
        %v851 = vunpack.c.0.s8 %v850
        %v852 = vlaneseq
        %v853 = vshrl.u32 %v852, 7
        %v854 = vsub.s32 %v851, %v853
        %v855 = vrot.slane %v833, %v854
        %v857 = vunpack.c.l.s4 1966171168
        %v858 = vunpack.c.0.s8 %v857
        %v859 = vlaneseq
        %v860 = vshrl.u32 %v859, 7
        %v861 = vsub.s32 %v858, %v860
        %v862 = vrot.slane %v834, %v861
        %v863 = vcombine.high %v841, %v841
        %v864 = vcombine.high %v848, %v848
        %v865 = vcombine.high %v855, %v855
        %v866 = vcombine.high %v862, %v862
        %s867 = scalar_lea.vmem %s290, 32 [#allocation6]
        %v868 = vld [vmem:[%s867] sm:$0xff]
        %v869 = vld [vmem:[%s867 + $0x8] sm:$0xff]
        %v870 = vld [vmem:[%s867 + $0x10] sm:$0xff]
        %v871 = vld [vmem:[%s867 + $0x18] sm:$0xff]
        %v872 = vlaneseq
        %v873 = vshrl.u32 %v872, 7
        %v874 = vsub.s32 0, %v873
        %v875 = vrot.slane %v791, %v874
        %v876 = vlaneseq
        %v877 = vshrl.u32 %v876, 7
        %v878 = vsub.s32 1, %v877
        %v879 = vrot.slane %v791, %v878
        %v880 = vlaneseq
        %v881 = vshrl.u32 %v880, 7
        %v882 = vsub.s32 0, %v881
        %v883 = vrot.slane %v805, %v882
        %v884 = vlaneseq
        %v885 = vshrl.u32 %v884, 7
        %v886 = vsub.s32 1, %v885
        %v887 = vrot.slane %v805, %v886
        %v888 = vlaneseq
        %v889 = vshrl.u32 %v888, 7
        %v890 = vsub.s32 0, %v889
        %v891 = vrot.slane %v813, %v890
        %v892 = vlaneseq
        %v893 = vshrl.u32 %v892, 7
        %v894 = vsub.s32 1, %v893
        %v895 = vrot.slane %v813, %v894
        %v896 = vlaneseq
        %v897 = vshrl.u32 %v896, 7
        %v898 = vsub.s32 0, %v897
        %v899 = vrot.slane %v815, %v898
        %v900 = vlaneseq
        %v901 = vshrl.u32 %v900, 7
        %v902 = vsub.s32 1, %v901
        %v903 = vrot.slane %v815, %v902
        %v904 = vlaneseq
        %v905 = vshrl.u32 %v904, 7
        %v906 = vsub.s32 0, %v905
        %v907 = vrot.slane %v798, %v906
        %v908 = vlaneseq
        %v909 = vshrl.u32 %v908, 7
        %v910 = vsub.s32 1, %v909
        %v911 = vrot.slane %v798, %v910
        %v912 = vlaneseq
        %v913 = vshrl.u32 %v912, 7
        %v914 = vsub.s32 0, %v913
        %v915 = vrot.slane %v812, %v914
        %v916 = vlaneseq
        %v917 = vshrl.u32 %v916, 7
        %v918 = vsub.s32 1, %v917
        %v919 = vrot.slane %v812, %v918
        %v920 = vlaneseq
        %v921 = vshrl.u32 %v920, 7
        %v922 = vsub.s32 0, %v921
        %v923 = vrot.slane %v814, %v922
        %v924 = vlaneseq
        %v925 = vshrl.u32 %v924, 7
        %v926 = vsub.s32 1, %v925
        %v927 = vrot.slane %v814, %v926
        %v928 = vlaneseq
        %v929 = vshrl.u32 %v928, 7
        %v930 = vsub.s32 0, %v929
        %v931 = vrot.slane %v816, %v930
        %v932 = vlaneseq
        %v933 = vshrl.u32 %v932, 7
        %v934 = vsub.s32 1, %v933
        %v935 = vrot.slane %v816, %v934
        %v936 = vlaneseq
        %v937 = vshrl.u32 %v936, 7
        %v938 = vsub.s32 0, %v937
        %v939 = vrot.slane %v841, %v938
        %v940 = vlaneseq
        %v941 = vshrl.u32 %v940, 7
        %v942 = vsub.s32 1, %v941
        %v943 = vrot.slane %v841, %v942
        %v944 = vlaneseq
        %v945 = vshrl.u32 %v944, 7
        %v946 = vsub.s32 0, %v945
        %v947 = vrot.slane %v855, %v946
        %v948 = vlaneseq
        %v949 = vshrl.u32 %v948, 7
        %v950 = vsub.s32 1, %v949
        %v951 = vrot.slane %v855, %v950
        %v952 = vlaneseq
        %v953 = vshrl.u32 %v952, 7
        %v954 = vsub.s32 0, %v953
        %v955 = vrot.slane %v863, %v954
        %v956 = vlaneseq
        %v957 = vshrl.u32 %v956, 7
        %v958 = vsub.s32 1, %v957
        %v959 = vrot.slane %v863, %v958
        %v960 = vlaneseq
        %v961 = vshrl.u32 %v960, 7
        %v962 = vsub.s32 0, %v961
        %v963 = vrot.slane %v865, %v962
        %v964 = vlaneseq
        %v965 = vshrl.u32 %v964, 7
        %v966 = vsub.s32 1, %v965
        %v967 = vrot.slane %v865, %v966
        %v968 = vlaneseq
        %v969 = vshrl.u32 %v968, 7
        %v970 = vsub.s32 0, %v969
        %v971 = vrot.slane %v848, %v970
        %v972 = vlaneseq
        %v973 = vshrl.u32 %v972, 7
        %v974 = vsub.s32 1, %v973
        %v975 = vrot.slane %v848, %v974
        %v976 = vlaneseq
        %v977 = vshrl.u32 %v976, 7
        %v978 = vsub.s32 0, %v977
        %v979 = vrot.slane %v862, %v978
        %v980 = vlaneseq
        %v981 = vshrl.u32 %v980, 7
        %v982 = vsub.s32 1, %v981
        %v983 = vrot.slane %v862, %v982
        %v984 = vlaneseq
        %v985 = vshrl.u32 %v984, 7
        %v986 = vsub.s32 0, %v985
        %v987 = vrot.slane %v864, %v986
        %v988 = vlaneseq
        %v989 = vshrl.u32 %v988, 7
        %v990 = vsub.s32 1, %v989
        %v991 = vrot.slane %v864, %v990
        %v992 = vlaneseq
        %v993 = vshrl.u32 %v992, 7
        %v994 = vsub.s32 0, %v993
        %v995 = vrot.slane %v866, %v994
        %v996 = vlaneseq
        %v997 = vshrl.u32 %v996, 7
        %v998 = vsub.s32 1, %v997
        %v999 = vrot.slane %v866, %v998
        %v1032 = vmul.f32 %v875, %v868
        %v1033 = vmul.f32 %v879, %v869
        %v1034 = vmul.f32 %v875, %v870
        %v1035 = vmul.f32 %v879, %v871
        %v1036 = vmul.f32 %v883, %v868
        %v1037 = vmul.f32 %v887, %v869
        %v1038 = vmul.f32 %v883, %v870
        %v1039 = vmul.f32 %v887, %v871
        %v1040 = vmul.f32 %v891, %v868
        %v1041 = vmul.f32 %v895, %v869
        %v1042 = vmul.f32 %v891, %v870
        %v1043 = vmul.f32 %v895, %v871
        %v1044 = vmul.f32 %v899, %v868
        %v1045 = vmul.f32 %v903, %v869
        %v1046 = vmul.f32 %v899, %v870
        %v1047 = vmul.f32 %v903, %v871
        %v1048 = vmul.f32 %v907, %v868
        %v1049 = vmul.f32 %v911, %v869
        %v1050 = vmul.f32 %v907, %v870
        %v1051 = vmul.f32 %v911, %v871
        %v1052 = vmul.f32 %v915, %v868
        %v1053 = vmul.f32 %v919, %v869
        %v1054 = vmul.f32 %v915, %v870
        %v1055 = vmul.f32 %v919, %v871
        %v1056 = vmul.f32 %v923, %v868
        %v1057 = vmul.f32 %v927, %v869
        %v1058 = vmul.f32 %v923, %v870
        %v1059 = vmul.f32 %v927, %v871
        %v1060 = vmul.f32 %v931, %v868
        %v1061 = vmul.f32 %v935, %v869
        %v1062 = vmul.f32 %v931, %v870
        %v1063 = vmul.f32 %v935, %v871
        %v1064 = vmul.f32 %v939, %v868
        %v1065 = vmul.f32 %v943, %v869
        %v1066 = vmul.f32 %v939, %v870
        %v1067 = vmul.f32 %v943, %v871
        %v1068 = vmul.f32 %v947, %v868
        %v1069 = vmul.f32 %v951, %v869
        %v1070 = vmul.f32 %v947, %v870
        %v1071 = vmul.f32 %v951, %v871
        %v1072 = vmul.f32 %v955, %v868
        %v1073 = vmul.f32 %v959, %v869
        %v1074 = vmul.f32 %v955, %v870
        %v1075 = vmul.f32 %v959, %v871
        %v1076 = vmul.f32 %v963, %v868
        %v1077 = vmul.f32 %v967, %v869
        %v1078 = vmul.f32 %v963, %v870
        %v1079 = vmul.f32 %v967, %v871
        %v1080 = vmul.f32 %v971, %v868
        %v1081 = vmul.f32 %v975, %v869
        %v1082 = vmul.f32 %v971, %v870
        %v1083 = vmul.f32 %v975, %v871
        %v1084 = vmul.f32 %v979, %v868
        %v1085 = vmul.f32 %v983, %v869
        %v1086 = vmul.f32 %v979, %v870
        %v1087 = vmul.f32 %v983, %v871
        %v1088 = vmul.f32 %v987, %v868
        %v1089 = vmul.f32 %v991, %v869
        %v1090 = vmul.f32 %v987, %v870
        %v1091 = vmul.f32 %v991, %v871
        %v1092 = vmul.f32 %v995, %v868
        %v1093 = vmul.f32 %v999, %v869
        %v1094 = vmul.f32 %v995, %v870
        %v1095 = vmul.f32 %v999, %v871
        %v1096 = vpack.c.bf16 %v1034, %v1032
        %v1097 = vpack.c.bf16 %v1035, %v1033
        %v1098 = vpack.c.bf16 %v1038, %v1036
        %v1099 = vpack.c.bf16 %v1039, %v1037
        %v1100 = vpack.c.bf16 %v1042, %v1040
        %v1101 = vpack.c.bf16 %v1043, %v1041
        %v1102 = vpack.c.bf16 %v1046, %v1044
        %v1103 = vpack.c.bf16 %v1047, %v1045
        %v1104 = vpack.c.bf16 %v1050, %v1048
        %v1105 = vpack.c.bf16 %v1051, %v1049
        %v1106 = vpack.c.bf16 %v1054, %v1052
        %v1107 = vpack.c.bf16 %v1055, %v1053
        %v1108 = vpack.c.bf16 %v1058, %v1056
        %v1109 = vpack.c.bf16 %v1059, %v1057
        %v1110 = vpack.c.bf16 %v1062, %v1060
        %v1111 = vpack.c.bf16 %v1063, %v1061
        %v1112 = vpack.c.bf16 %v1066, %v1064
        %v1113 = vpack.c.bf16 %v1067, %v1065
        %v1114 = vpack.c.bf16 %v1070, %v1068
        %v1115 = vpack.c.bf16 %v1071, %v1069
        %v1116 = vpack.c.bf16 %v1074, %v1072
        %v1117 = vpack.c.bf16 %v1075, %v1073
        %v1118 = vpack.c.bf16 %v1078, %v1076
        %v1119 = vpack.c.bf16 %v1079, %v1077
        %v1120 = vpack.c.bf16 %v1082, %v1080
        %v1121 = vpack.c.bf16 %v1083, %v1081
        %v1122 = vpack.c.bf16 %v1086, %v1084
        %v1123 = vpack.c.bf16 %v1087, %v1085
        %v1124 = vpack.c.bf16 %v1090, %v1088
        %v1125 = vpack.c.bf16 %v1091, %v1089
        %v1126 = vpack.c.bf16 %v1094, %v1092
        %v1127 = vpack.c.bf16 %v1095, %v1093
        %1128 = vst [vmem:[#allocation2 + $0x100] sm:$0xff] %v1096
        %1129 = vst [vmem:[#allocation2 + $0x108] sm:$0xff] %v1097
        %1130 = vst [vmem:[#allocation2 + $0x110] sm:$0xff] %v1098
        %1131 = vst [vmem:[#allocation2 + $0x118] sm:$0xff] %v1099
        %1132 = vst [vmem:[#allocation2 + $0x120] sm:$0xff] %v1100
        %1133 = vst [vmem:[#allocation2 + $0x128] sm:$0xff] %v1101
        %1134 = vst [vmem:[#allocation2 + $0x130] sm:$0xff] %v1102
        %1135 = vst [vmem:[#allocation2 + $0x138] sm:$0xff] %v1103
        %1136 = vst [vmem:[#allocation2 + $0x140] sm:$0xff] %v1104
        %1137 = vst [vmem:[#allocation2 + $0x148] sm:$0xff] %v1105
        %1138 = vst [vmem:[#allocation2 + $0x150] sm:$0xff] %v1106
        %1139 = vst [vmem:[#allocation2 + $0x158] sm:$0xff] %v1107
        %1140 = vst [vmem:[#allocation2 + $0x160] sm:$0xff] %v1108
        %1141 = vst [vmem:[#allocation2 + $0x168] sm:$0xff] %v1109
        %1142 = vst [vmem:[#allocation2 + $0x170] sm:$0xff] %v1110
        %1143 = vst [vmem:[#allocation2 + $0x178] sm:$0xff] %v1111
        %1144 = vst [vmem:[#allocation2 + $0x180] sm:$0xff] %v1112
        %1145 = vst [vmem:[#allocation2 + $0x188] sm:$0xff] %v1113
        %1146 = vst [vmem:[#allocation2 + $0x190] sm:$0xff] %v1114
        %1147 = vst [vmem:[#allocation2 + $0x198] sm:$0xff] %v1115
        %1148 = vst [vmem:[#allocation2 + $0x1a0] sm:$0xff] %v1116
        %1149 = vst [vmem:[#allocation2 + $0x1a8] sm:$0xff] %v1117
        %1150 = vst [vmem:[#allocation2 + $0x1b0] sm:$0xff] %v1118
        %1151 = vst [vmem:[#allocation2 + $0x1b8] sm:$0xff] %v1119
        %1152 = vst [vmem:[#allocation2 + $0x1c0] sm:$0xff] %v1120
        %1153 = vst [vmem:[#allocation2 + $0x1c8] sm:$0xff] %v1121
        %1154 = vst [vmem:[#allocation2 + $0x1d0] sm:$0xff] %v1122
        %1155 = vst [vmem:[#allocation2 + $0x1d8] sm:$0xff] %v1123
        %1156 = vst [vmem:[#allocation2 + $0x1e0] sm:$0xff] %v1124
        %1157 = vst [vmem:[#allocation2 + $0x1e8] sm:$0xff] %v1125
        %1158 = vst [vmem:[#allocation2 + $0x1f0] sm:$0xff] %v1126
        %1159 = vst [vmem:[#allocation2 + $0x1f8] sm:$0xff] %v1127
        %s1160 = scalar_lea.vmem %s299, 64 [#allocation8]
        %v1161 = vld [vmem:[%s1160] sm:$0xff]
        %v1162 = vld [vmem:[%s1160 + $0x8] sm:$0xff]
        %v1163 = vld [vmem:[%s1160 + $0x10] sm:$0xff]
        %v1164 = vld [vmem:[%s1160 + $0x18] sm:$0xff]
        %v1169 = vcombine.low %v1161, %v1162
        %v1170 = vcombine.high %v1161, %v1162
        %v1172 = vunpack.c.l.s4 1966171168
        %v1173 = vunpack.c.0.s8 %v1172
        %v1174 = vlaneseq
        %v1175 = vshrl.u32 %v1174, 7
        %v1176 = vsub.s32 %v1173, %v1175
        %v1177 = vrot.slane %v1169, %v1176
        %v1179 = vunpack.c.l.s4 1966171168
        %v1180 = vunpack.c.0.s8 %v1179
        %v1181 = vlaneseq
        %v1182 = vshrl.u32 %v1181, 7
        %v1183 = vsub.s32 %v1180, %v1182
        %v1184 = vrot.slane %v1170, %v1183
        %v1185 = vcombine.high %v1177, %v1177
        %v1186 = vcombine.high %v1184, %v1184
        %v1188 = vunpack.c.l.s4 1966171168
        %v1189 = vunpack.c.0.s8 %v1188
        %v1190 = vlaneseq
        %v1191 = vshrl.u32 %v1190, 7
        %v1192 = vsub.s32 %v1189, %v1191
        %v1193 = vrot.slane %v1177, %v1192
        %v1195 = vunpack.c.l.s4 1966171168
        %v1196 = vunpack.c.0.s8 %v1195
        %v1197 = vlaneseq
        %v1198 = vshrl.u32 %v1197, 7
        %v1199 = vsub.s32 %v1196, %v1198
        %v1200 = vrot.slane %v1184, %v1199
        %v1202 = vunpack.c.l.s4 1966171168
        %v1203 = vunpack.c.0.s8 %v1202
        %v1204 = vlaneseq
        %v1205 = vshrl.u32 %v1204, 7
        %v1206 = vsub.s32 %v1203, %v1205
        %v1207 = vrot.slane %v1185, %v1206
        %v1209 = vunpack.c.l.s4 1966171168
        %v1210 = vunpack.c.0.s8 %v1209
        %v1211 = vlaneseq
        %v1212 = vshrl.u32 %v1211, 7
        %v1213 = vsub.s32 %v1210, %v1212
        %v1214 = vrot.slane %v1186, %v1213
        %v1215 = vcombine.high %v1193, %v1193
        %v1216 = vcombine.high %v1200, %v1200
        %v1217 = vcombine.high %v1207, %v1207
        %v1218 = vcombine.high %v1214, %v1214
        %v1219 = vcombine.low %v1163, %v1164
        %v1220 = vcombine.high %v1163, %v1164
        %v1222 = vunpack.c.l.s4 1966171168
        %v1223 = vunpack.c.0.s8 %v1222
        %v1224 = vlaneseq
        %v1225 = vshrl.u32 %v1224, 7
        %v1226 = vsub.s32 %v1223, %v1225
        %v1227 = vrot.slane %v1219, %v1226
        %v1229 = vunpack.c.l.s4 1966171168
        %v1230 = vunpack.c.0.s8 %v1229
        %v1231 = vlaneseq
        %v1232 = vshrl.u32 %v1231, 7
        %v1233 = vsub.s32 %v1230, %v1232
        %v1234 = vrot.slane %v1220, %v1233
        %v1235 = vcombine.high %v1227, %v1227
        %v1236 = vcombine.high %v1234, %v1234
        %v1238 = vunpack.c.l.s4 1966171168
        %v1239 = vunpack.c.0.s8 %v1238
        %v1240 = vlaneseq
        %v1241 = vshrl.u32 %v1240, 7
        %v1242 = vsub.s32 %v1239, %v1241
        %v1243 = vrot.slane %v1227, %v1242
        %v1245 = vunpack.c.l.s4 1966171168
        %v1246 = vunpack.c.0.s8 %v1245
        %v1247 = vlaneseq
        %v1248 = vshrl.u32 %v1247, 7
        %v1249 = vsub.s32 %v1246, %v1248
        %v1250 = vrot.slane %v1234, %v1249
        %v1252 = vunpack.c.l.s4 1966171168
        %v1253 = vunpack.c.0.s8 %v1252
        %v1254 = vlaneseq
        %v1255 = vshrl.u32 %v1254, 7
        %v1256 = vsub.s32 %v1253, %v1255
        %v1257 = vrot.slane %v1235, %v1256
        %v1259 = vunpack.c.l.s4 1966171168
        %v1260 = vunpack.c.0.s8 %v1259
        %v1261 = vlaneseq
        %v1262 = vshrl.u32 %v1261, 7
        %v1263 = vsub.s32 %v1260, %v1262
        %v1264 = vrot.slane %v1236, %v1263
        %v1265 = vcombine.high %v1243, %v1243
        %v1266 = vcombine.high %v1250, %v1250
        %v1267 = vcombine.high %v1257, %v1257
        %v1268 = vcombine.high %v1264, %v1264
        %s1269 = scalar_lea.vmem %s290, 64 [#allocation6]
        %v1270 = vld [vmem:[%s1269] sm:$0xff]
        %v1271 = vld [vmem:[%s1269 + $0x8] sm:$0xff]
        %v1272 = vld [vmem:[%s1269 + $0x10] sm:$0xff]
        %v1273 = vld [vmem:[%s1269 + $0x18] sm:$0xff]
        %v1274 = vlaneseq
        %v1275 = vshrl.u32 %v1274, 7
        %v1276 = vsub.s32 0, %v1275
        %v1277 = vrot.slane %v1193, %v1276
        %v1278 = vlaneseq
        %v1279 = vshrl.u32 %v1278, 7
        %v1280 = vsub.s32 1, %v1279
        %v1281 = vrot.slane %v1193, %v1280
        %v1282 = vlaneseq
        %v1283 = vshrl.u32 %v1282, 7
        %v1284 = vsub.s32 0, %v1283
        %v1285 = vrot.slane %v1207, %v1284
        %v1286 = vlaneseq
        %v1287 = vshrl.u32 %v1286, 7
        %v1288 = vsub.s32 1, %v1287
        %v1289 = vrot.slane %v1207, %v1288
        %v1290 = vlaneseq
        %v1291 = vshrl.u32 %v1290, 7
        %v1292 = vsub.s32 0, %v1291
        %v1293 = vrot.slane %v1215, %v1292
        %v1294 = vlaneseq
        %v1295 = vshrl.u32 %v1294, 7
        %v1296 = vsub.s32 1, %v1295
        %v1297 = vrot.slane %v1215, %v1296
        %v1298 = vlaneseq
        %v1299 = vshrl.u32 %v1298, 7
        %v1300 = vsub.s32 0, %v1299
        %v1301 = vrot.slane %v1217, %v1300
        %v1302 = vlaneseq
        %v1303 = vshrl.u32 %v1302, 7
        %v1304 = vsub.s32 1, %v1303
        %v1305 = vrot.slane %v1217, %v1304
        %v1306 = vlaneseq
        %v1307 = vshrl.u32 %v1306, 7
        %v1308 = vsub.s32 0, %v1307
        %v1309 = vrot.slane %v1200, %v1308
        %v1310 = vlaneseq
        %v1311 = vshrl.u32 %v1310, 7
        %v1312 = vsub.s32 1, %v1311
        %v1313 = vrot.slane %v1200, %v1312
        %v1314 = vlaneseq
        %v1315 = vshrl.u32 %v1314, 7
        %v1316 = vsub.s32 0, %v1315
        %v1317 = vrot.slane %v1214, %v1316
        %v1318 = vlaneseq
        %v1319 = vshrl.u32 %v1318, 7
        %v1320 = vsub.s32 1, %v1319
        %v1321 = vrot.slane %v1214, %v1320
        %v1322 = vlaneseq
        %v1323 = vshrl.u32 %v1322, 7
        %v1324 = vsub.s32 0, %v1323
        %v1325 = vrot.slane %v1216, %v1324
        %v1326 = vlaneseq
        %v1327 = vshrl.u32 %v1326, 7
        %v1328 = vsub.s32 1, %v1327
        %v1329 = vrot.slane %v1216, %v1328
        %v1330 = vlaneseq
        %v1331 = vshrl.u32 %v1330, 7
        %v1332 = vsub.s32 0, %v1331
        %v1333 = vrot.slane %v1218, %v1332
        %v1334 = vlaneseq
        %v1335 = vshrl.u32 %v1334, 7
        %v1336 = vsub.s32 1, %v1335
        %v1337 = vrot.slane %v1218, %v1336
        %v1338 = vlaneseq
        %v1339 = vshrl.u32 %v1338, 7
        %v1340 = vsub.s32 0, %v1339
        %v1341 = vrot.slane %v1243, %v1340
        %v1342 = vlaneseq
        %v1343 = vshrl.u32 %v1342, 7
        %v1344 = vsub.s32 1, %v1343
        %v1345 = vrot.slane %v1243, %v1344
        %v1346 = vlaneseq
        %v1347 = vshrl.u32 %v1346, 7
        %v1348 = vsub.s32 0, %v1347
        %v1349 = vrot.slane %v1257, %v1348
        %v1350 = vlaneseq
        %v1351 = vshrl.u32 %v1350, 7
        %v1352 = vsub.s32 1, %v1351
        %v1353 = vrot.slane %v1257, %v1352
        %v1354 = vlaneseq
        %v1355 = vshrl.u32 %v1354, 7
        %v1356 = vsub.s32 0, %v1355
        %v1357 = vrot.slane %v1265, %v1356
        %v1358 = vlaneseq
        %v1359 = vshrl.u32 %v1358, 7
        %v1360 = vsub.s32 1, %v1359
        %v1361 = vrot.slane %v1265, %v1360
        %v1362 = vlaneseq
        %v1363 = vshrl.u32 %v1362, 7
        %v1364 = vsub.s32 0, %v1363
        %v1365 = vrot.slane %v1267, %v1364
        %v1366 = vlaneseq
        %v1367 = vshrl.u32 %v1366, 7
        %v1368 = vsub.s32 1, %v1367
        %v1369 = vrot.slane %v1267, %v1368
        %v1370 = vlaneseq
        %v1371 = vshrl.u32 %v1370, 7
        %v1372 = vsub.s32 0, %v1371
        %v1373 = vrot.slane %v1250, %v1372
        %v1374 = vlaneseq
        %v1375 = vshrl.u32 %v1374, 7
        %v1376 = vsub.s32 1, %v1375
        %v1377 = vrot.slane %v1250, %v1376
        %v1378 = vlaneseq
        %v1379 = vshrl.u32 %v1378, 7
        %v1380 = vsub.s32 0, %v1379
        %v1381 = vrot.slane %v1264, %v1380
        %v1382 = vlaneseq
        %v1383 = vshrl.u32 %v1382, 7
        %v1384 = vsub.s32 1, %v1383
        %v1385 = vrot.slane %v1264, %v1384
        %v1386 = vlaneseq
        %v1387 = vshrl.u32 %v1386, 7
        %v1388 = vsub.s32 0, %v1387
        %v1389 = vrot.slane %v1266, %v1388
        %v1390 = vlaneseq
        %v1391 = vshrl.u32 %v1390, 7
        %v1392 = vsub.s32 1, %v1391
        %v1393 = vrot.slane %v1266, %v1392
        %v1394 = vlaneseq
        %v1395 = vshrl.u32 %v1394, 7
        %v1396 = vsub.s32 0, %v1395
        %v1397 = vrot.slane %v1268, %v1396
        %v1398 = vlaneseq
        %v1399 = vshrl.u32 %v1398, 7
        %v1400 = vsub.s32 1, %v1399
        %v1401 = vrot.slane %v1268, %v1400
        %v1434 = vmul.f32 %v1277, %v1270
        %v1435 = vmul.f32 %v1281, %v1271
        %v1436 = vmul.f32 %v1277, %v1272
        %v1437 = vmul.f32 %v1281, %v1273
        %v1438 = vmul.f32 %v1285, %v1270
        %v1439 = vmul.f32 %v1289, %v1271
        %v1440 = vmul.f32 %v1285, %v1272
        %v1441 = vmul.f32 %v1289, %v1273
        %v1442 = vmul.f32 %v1293, %v1270
        %v1443 = vmul.f32 %v1297, %v1271
        %v1444 = vmul.f32 %v1293, %v1272
        %v1445 = vmul.f32 %v1297, %v1273
        %v1446 = vmul.f32 %v1301, %v1270
        %v1447 = vmul.f32 %v1305, %v1271
        %v1448 = vmul.f32 %v1301, %v1272
        %v1449 = vmul.f32 %v1305, %v1273
        %v1450 = vmul.f32 %v1309, %v1270
        %v1451 = vmul.f32 %v1313, %v1271
        %v1452 = vmul.f32 %v1309, %v1272
        %v1453 = vmul.f32 %v1313, %v1273
        %v1454 = vmul.f32 %v1317, %v1270
        %v1455 = vmul.f32 %v1321, %v1271
        %v1456 = vmul.f32 %v1317, %v1272
        %v1457 = vmul.f32 %v1321, %v1273
        %v1458 = vmul.f32 %v1325, %v1270
        %v1459 = vmul.f32 %v1329, %v1271
        %v1460 = vmul.f32 %v1325, %v1272
        %v1461 = vmul.f32 %v1329, %v1273
        %v1462 = vmul.f32 %v1333, %v1270
        %v1463 = vmul.f32 %v1337, %v1271
        %v1464 = vmul.f32 %v1333, %v1272
        %v1465 = vmul.f32 %v1337, %v1273
        %v1466 = vmul.f32 %v1341, %v1270
        %v1467 = vmul.f32 %v1345, %v1271
        %v1468 = vmul.f32 %v1341, %v1272
        %v1469 = vmul.f32 %v1345, %v1273
        %v1470 = vmul.f32 %v1349, %v1270
        %v1471 = vmul.f32 %v1353, %v1271
        %v1472 = vmul.f32 %v1349, %v1272
        %v1473 = vmul.f32 %v1353, %v1273
        %v1474 = vmul.f32 %v1357, %v1270
        %v1475 = vmul.f32 %v1361, %v1271
        %v1476 = vmul.f32 %v1357, %v1272
        %v1477 = vmul.f32 %v1361, %v1273
        %v1478 = vmul.f32 %v1365, %v1270
        %v1479 = vmul.f32 %v1369, %v1271
        %v1480 = vmul.f32 %v1365, %v1272
        %v1481 = vmul.f32 %v1369, %v1273
        %v1482 = vmul.f32 %v1373, %v1270
        %v1483 = vmul.f32 %v1377, %v1271
        %v1484 = vmul.f32 %v1373, %v1272
        %v1485 = vmul.f32 %v1377, %v1273
        %v1486 = vmul.f32 %v1381, %v1270
        %v1487 = vmul.f32 %v1385, %v1271
        %v1488 = vmul.f32 %v1381, %v1272
        %v1489 = vmul.f32 %v1385, %v1273
        %v1490 = vmul.f32 %v1389, %v1270
        %v1491 = vmul.f32 %v1393, %v1271
        %v1492 = vmul.f32 %v1389, %v1272
        %v1493 = vmul.f32 %v1393, %v1273
        %v1494 = vmul.f32 %v1397, %v1270
        %v1495 = vmul.f32 %v1401, %v1271
        %v1496 = vmul.f32 %v1397, %v1272
        %v1497 = vmul.f32 %v1401, %v1273
        %v1498 = vpack.c.bf16 %v1436, %v1434
        %v1499 = vpack.c.bf16 %v1437, %v1435
        %v1500 = vpack.c.bf16 %v1440, %v1438
        %v1501 = vpack.c.bf16 %v1441, %v1439
        %v1502 = vpack.c.bf16 %v1444, %v1442
        %v1503 = vpack.c.bf16 %v1445, %v1443
        %v1504 = vpack.c.bf16 %v1448, %v1446
        %v1505 = vpack.c.bf16 %v1449, %v1447
        %v1506 = vpack.c.bf16 %v1452, %v1450
        %v1507 = vpack.c.bf16 %v1453, %v1451
        %v1508 = vpack.c.bf16 %v1456, %v1454
        %v1509 = vpack.c.bf16 %v1457, %v1455
        %v1510 = vpack.c.bf16 %v1460, %v1458
        %v1511 = vpack.c.bf16 %v1461, %v1459
        %v1512 = vpack.c.bf16 %v1464, %v1462
        %v1513 = vpack.c.bf16 %v1465, %v1463
        %v1514 = vpack.c.bf16 %v1468, %v1466
        %v1515 = vpack.c.bf16 %v1469, %v1467
        %v1516 = vpack.c.bf16 %v1472, %v1470
        %v1517 = vpack.c.bf16 %v1473, %v1471
        %v1518 = vpack.c.bf16 %v1476, %v1474
        %v1519 = vpack.c.bf16 %v1477, %v1475
        %v1520 = vpack.c.bf16 %v1480, %v1478
        %v1521 = vpack.c.bf16 %v1481, %v1479
        %v1522 = vpack.c.bf16 %v1484, %v1482
        %v1523 = vpack.c.bf16 %v1485, %v1483
        %v1524 = vpack.c.bf16 %v1488, %v1486
        %v1525 = vpack.c.bf16 %v1489, %v1487
        %v1526 = vpack.c.bf16 %v1492, %v1490
        %v1527 = vpack.c.bf16 %v1493, %v1491
        %v1528 = vpack.c.bf16 %v1496, %v1494
        %v1529 = vpack.c.bf16 %v1497, %v1495
        %1530 = vst [vmem:[#allocation2 + $0x200] sm:$0xff] %v1498
        %1531 = vst [vmem:[#allocation2 + $0x208] sm:$0xff] %v1499
        %1532 = vst [vmem:[#allocation2 + $0x210] sm:$0xff] %v1500
        %1533 = vst [vmem:[#allocation2 + $0x218] sm:$0xff] %v1501
        %1534 = vst [vmem:[#allocation2 + $0x220] sm:$0xff] %v1502
        %1535 = vst [vmem:[#allocation2 + $0x228] sm:$0xff] %v1503
        %1536 = vst [vmem:[#allocation2 + $0x230] sm:$0xff] %v1504
        %1537 = vst [vmem:[#allocation2 + $0x238] sm:$0xff] %v1505
        %1538 = vst [vmem:[#allocation2 + $0x240] sm:$0xff] %v1506
        %1539 = vst [vmem:[#allocation2 + $0x248] sm:$0xff] %v1507
        %1540 = vst [vmem:[#allocation2 + $0x250] sm:$0xff] %v1508
        %1541 = vst [vmem:[#allocation2 + $0x258] sm:$0xff] %v1509
        %1542 = vst [vmem:[#allocation2 + $0x260] sm:$0xff] %v1510
        %1543 = vst [vmem:[#allocation2 + $0x268] sm:$0xff] %v1511
        %1544 = vst [vmem:[#allocation2 + $0x270] sm:$0xff] %v1512
        %1545 = vst [vmem:[#allocation2 + $0x278] sm:$0xff] %v1513
        %1546 = vst [vmem:[#allocation2 + $0x280] sm:$0xff] %v1514
        %1547 = vst [vmem:[#allocation2 + $0x288] sm:$0xff] %v1515
        %1548 = vst [vmem:[#allocation2 + $0x290] sm:$0xff] %v1516
        %1549 = vst [vmem:[#allocation2 + $0x298] sm:$0xff] %v1517
        %1550 = vst [vmem:[#allocation2 + $0x2a0] sm:$0xff] %v1518
        %1551 = vst [vmem:[#allocation2 + $0x2a8] sm:$0xff] %v1519
        %1552 = vst [vmem:[#allocation2 + $0x2b0] sm:$0xff] %v1520
        %1553 = vst [vmem:[#allocation2 + $0x2b8] sm:$0xff] %v1521
        %1554 = vst [vmem:[#allocation2 + $0x2c0] sm:$0xff] %v1522
        %1555 = vst [vmem:[#allocation2 + $0x2c8] sm:$0xff] %v1523
        %1556 = vst [vmem:[#allocation2 + $0x2d0] sm:$0xff] %v1524
        %1557 = vst [vmem:[#allocation2 + $0x2d8] sm:$0xff] %v1525
        %1558 = vst [vmem:[#allocation2 + $0x2e0] sm:$0xff] %v1526
        %1559 = vst [vmem:[#allocation2 + $0x2e8] sm:$0xff] %v1527
        %1560 = vst [vmem:[#allocation2 + $0x2f0] sm:$0xff] %v1528
        %1561 = vst [vmem:[#allocation2 + $0x2f8] sm:$0xff] %v1529
        %v1562 = vld [vmem:[#allocation3] sm:$0xff]
        %v1563 = vld [vmem:[#allocation3 + $0x8] sm:$0xff]
        %v1564 = vld [vmem:[#allocation3 + $0x10] sm:$0xff]
        %v1565 = vld [vmem:[#allocation3 + $0x18] sm:$0xff]
        %v1566 = vld [vmem:[#allocation3 + $0x20] sm:$0xff]
        %v1567 = vld [vmem:[#allocation3 + $0x28] sm:$0xff]
        %v1568 = vld [vmem:[#allocation3 + $0x30] sm:$0xff]
        %v1569 = vld [vmem:[#allocation3 + $0x38] sm:$0xff]
        %v1570 = vld [vmem:[#allocation3 + $0x40] sm:$0xff]
        %v1571 = vld [vmem:[#allocation3 + $0x48] sm:$0xff]
        %v1572 = vld [vmem:[#allocation3 + $0x50] sm:$0xff]
        %v1573 = vld [vmem:[#allocation3 + $0x58] sm:$0xff]
        %v1574 = vld [vmem:[#allocation3 + $0x60] sm:$0xff]
        %v1575 = vld [vmem:[#allocation3 + $0x68] sm:$0xff]
        %v1576 = vld [vmem:[#allocation3 + $0x70] sm:$0xff]
        %v1577 = vld [vmem:[#allocation3 + $0x78] sm:$0xff]
        %v1578 = vld [vmem:[#allocation3 + $0x80] sm:$0xff]
        %v1579 = vld [vmem:[#allocation3 + $0x88] sm:$0xff]
        %v1580 = vld [vmem:[#allocation3 + $0x90] sm:$0xff]
        %v1581 = vld [vmem:[#allocation3 + $0x98] sm:$0xff]
        %v1582 = vld [vmem:[#allocation3 + $0xa0] sm:$0xff]
        %v1583 = vld [vmem:[#allocation3 + $0xa8] sm:$0xff]
        %v1584 = vld [vmem:[#allocation3 + $0xb0] sm:$0xff]
        %v1585 = vld [vmem:[#allocation3 + $0xb8] sm:$0xff]
        %v1586 = vld [vmem:[#allocation2] sm:$0xff]
        %v1587 = vld [vmem:[#allocation2 + $0x8] sm:$0xff]
        %v1588 = vld [vmem:[#allocation2 + $0x10] sm:$0xff]
        %v1589 = vld [vmem:[#allocation2 + $0x18] sm:$0xff]
        %v1590 = vld [vmem:[#allocation2 + $0x20] sm:$0xff]
        %v1591 = vld [vmem:[#allocation2 + $0x28] sm:$0xff]
        %v1592 = vld [vmem:[#allocation2 + $0x30] sm:$0xff]
        %v1593 = vld [vmem:[#allocation2 + $0x38] sm:$0xff]
        %v1594 = vld [vmem:[#allocation2 + $0x40] sm:$0xff]
        %v1595 = vld [vmem:[#allocation2 + $0x48] sm:$0xff]
        %v1596 = vld [vmem:[#allocation2 + $0x50] sm:$0xff]
        %v1597 = vld [vmem:[#allocation2 + $0x58] sm:$0xff]
        %v1598 = vld [vmem:[#allocation2 + $0x60] sm:$0xff]
        %v1599 = vld [vmem:[#allocation2 + $0x68] sm:$0xff]
        %v1600 = vld [vmem:[#allocation2 + $0x70] sm:$0xff]
        %v1601 = vld [vmem:[#allocation2 + $0x78] sm:$0xff]
        %v1602 = vld [vmem:[#allocation2 + $0x80] sm:$0xff]
        %v1603 = vld [vmem:[#allocation2 + $0x88] sm:$0xff]
        %v1604 = vld [vmem:[#allocation2 + $0x90] sm:$0xff]
        %v1605 = vld [vmem:[#allocation2 + $0x98] sm:$0xff]
        %v1606 = vld [vmem:[#allocation2 + $0xa0] sm:$0xff]
        %v1607 = vld [vmem:[#allocation2 + $0xa8] sm:$0xff]
        %v1608 = vld [vmem:[#allocation2 + $0xb0] sm:$0xff]
        %v1609 = vld [vmem:[#allocation2 + $0xb8] sm:$0xff]
        %v1610 = vld [vmem:[#allocation2 + $0xc0] sm:$0xff]
        %v1611 = vld [vmem:[#allocation2 + $0xc8] sm:$0xff]
        %v1612 = vld [vmem:[#allocation2 + $0xd0] sm:$0xff]
        %v1613 = vld [vmem:[#allocation2 + $0xd8] sm:$0xff]
        %v1614 = vld [vmem:[#allocation2 + $0xe0] sm:$0xff]
        %v1615 = vld [vmem:[#allocation2 + $0xe8] sm:$0xff]
        %v1616 = vld [vmem:[#allocation2 + $0xf0] sm:$0xff]
        %v1617 = vld [vmem:[#allocation2 + $0xf8] sm:$0xff]
        %v1618 = vld [vmem:[#allocation2 + $0x100] sm:$0xff]
        %v1619 = vld [vmem:[#allocation2 + $0x108] sm:$0xff]
        %v1620 = vld [vmem:[#allocation2 + $0x110] sm:$0xff]
        %v1621 = vld [vmem:[#allocation2 + $0x118] sm:$0xff]
        %v1622 = vld [vmem:[#allocation2 + $0x120] sm:$0xff]
        %v1623 = vld [vmem:[#allocation2 + $0x128] sm:$0xff]
        %v1624 = vld [vmem:[#allocation2 + $0x130] sm:$0xff]
        %v1625 = vld [vmem:[#allocation2 + $0x138] sm:$0xff]
        %v1626 = vld [vmem:[#allocation2 + $0x140] sm:$0xff]
        %v1627 = vld [vmem:[#allocation2 + $0x148] sm:$0xff]
        %v1628 = vld [vmem:[#allocation2 + $0x150] sm:$0xff]
        %v1629 = vld [vmem:[#allocation2 + $0x158] sm:$0xff]
        %v1630 = vld [vmem:[#allocation2 + $0x160] sm:$0xff]
        %v1631 = vld [vmem:[#allocation2 + $0x168] sm:$0xff]
        %v1632 = vld [vmem:[#allocation2 + $0x170] sm:$0xff]
        %v1633 = vld [vmem:[#allocation2 + $0x178] sm:$0xff]
        %v1634 = vld [vmem:[#allocation2 + $0x180] sm:$0xff]
        %v1635 = vld [vmem:[#allocation2 + $0x188] sm:$0xff]
        %v1636 = vld [vmem:[#allocation2 + $0x190] sm:$0xff]
        %v1637 = vld [vmem:[#allocation2 + $0x198] sm:$0xff]
        %v1638 = vld [vmem:[#allocation2 + $0x1a0] sm:$0xff]
        %v1639 = vld [vmem:[#allocation2 + $0x1a8] sm:$0xff]
        %v1640 = vld [vmem:[#allocation2 + $0x1b0] sm:$0xff]
        %v1641 = vld [vmem:[#allocation2 + $0x1b8] sm:$0xff]
        %v1642 = vld [vmem:[#allocation2 + $0x1c0] sm:$0xff]
        %v1643 = vld [vmem:[#allocation2 + $0x1c8] sm:$0xff]
        %v1644 = vld [vmem:[#allocation2 + $0x1d0] sm:$0xff]
        %v1645 = vld [vmem:[#allocation2 + $0x1d8] sm:$0xff]
        %v1646 = vld [vmem:[#allocation2 + $0x1e0] sm:$0xff]
        %v1647 = vld [vmem:[#allocation2 + $0x1e8] sm:$0xff]
        %v1648 = vld [vmem:[#allocation2 + $0x1f0] sm:$0xff]
        %v1649 = vld [vmem:[#allocation2 + $0x1f8] sm:$0xff]
        %v1650 = vld [vmem:[#allocation2 + $0x200] sm:$0xff]
        %v1651 = vld [vmem:[#allocation2 + $0x208] sm:$0xff]
        %v1652 = vld [vmem:[#allocation2 + $0x210] sm:$0xff]
        %v1653 = vld [vmem:[#allocation2 + $0x218] sm:$0xff]
        %v1654 = vld [vmem:[#allocation2 + $0x220] sm:$0xff]
        %v1655 = vld [vmem:[#allocation2 + $0x228] sm:$0xff]
        %v1656 = vld [vmem:[#allocation2 + $0x230] sm:$0xff]
        %v1657 = vld [vmem:[#allocation2 + $0x238] sm:$0xff]
        %v1658 = vld [vmem:[#allocation2 + $0x240] sm:$0xff]
        %v1659 = vld [vmem:[#allocation2 + $0x248] sm:$0xff]
        %v1660 = vld [vmem:[#allocation2 + $0x250] sm:$0xff]
        %v1661 = vld [vmem:[#allocation2 + $0x258] sm:$0xff]
        %v1662 = vld [vmem:[#allocation2 + $0x260] sm:$0xff]
        %v1663 = vld [vmem:[#allocation2 + $0x268] sm:$0xff]
        %v1664 = vld [vmem:[#allocation2 + $0x270] sm:$0xff]
        %v1665 = vld [vmem:[#allocation2 + $0x278] sm:$0xff]
        %v1666 = vld [vmem:[#allocation2 + $0x280] sm:$0xff]
        %v1667 = vld [vmem:[#allocation2 + $0x288] sm:$0xff]
        %v1668 = vld [vmem:[#allocation2 + $0x290] sm:$0xff]
        %v1669 = vld [vmem:[#allocation2 + $0x298] sm:$0xff]
        %v1670 = vld [vmem:[#allocation2 + $0x2a0] sm:$0xff]
        %v1671 = vld [vmem:[#allocation2 + $0x2a8] sm:$0xff]
        %v1672 = vld [vmem:[#allocation2 + $0x2b0] sm:$0xff]
        %v1673 = vld [vmem:[#allocation2 + $0x2b8] sm:$0xff]
        %v1674 = vld [vmem:[#allocation2 + $0x2c0] sm:$0xff]
        %v1675 = vld [vmem:[#allocation2 + $0x2c8] sm:$0xff]
        %v1676 = vld [vmem:[#allocation2 + $0x2d0] sm:$0xff]
        %v1677 = vld [vmem:[#allocation2 + $0x2d8] sm:$0xff]
        %v1678 = vld [vmem:[#allocation2 + $0x2e0] sm:$0xff]
        %v1679 = vld [vmem:[#allocation2 + $0x2e8] sm:$0xff]
        %v1680 = vld [vmem:[#allocation2 + $0x2f0] sm:$0xff]
        %v1681 = vld [vmem:[#allocation2 + $0x2f8] sm:$0xff]
        %v1706 = vunpack.c.l.b16 %v1562
        %v1707 = vunpack.c.h.b16 %v1562
        %v1708 = vunpack.c.l.b16 %v1563
        %v1709 = vunpack.c.h.b16 %v1563
        %v1710 = vunpack.c.l.b16 %v1564
        %v1711 = vunpack.c.h.b16 %v1564
        %v1712 = vunpack.c.l.b16 %v1565
        %v1713 = vunpack.c.h.b16 %v1565
        %v1714 = vunpack.c.l.b16 %v1566
        %v1715 = vunpack.c.h.b16 %v1566
        %v1716 = vunpack.c.l.b16 %v1567
        %v1717 = vunpack.c.h.b16 %v1567
        %v1718 = vunpack.c.l.b16 %v1568
        %v1719 = vunpack.c.h.b16 %v1568
        %v1720 = vunpack.c.l.b16 %v1569
        %v1721 = vunpack.c.h.b16 %v1569
        %v1722 = vunpack.c.l.b16 %v1570
        %v1723 = vunpack.c.h.b16 %v1570
        %v1724 = vunpack.c.l.b16 %v1571
        %v1725 = vunpack.c.h.b16 %v1571
        %v1726 = vunpack.c.l.b16 %v1572
        %v1727 = vunpack.c.h.b16 %v1572
        %v1728 = vunpack.c.l.b16 %v1573
        %v1729 = vunpack.c.h.b16 %v1573
        %v1730 = vunpack.c.l.b16 %v1574
        %v1731 = vunpack.c.h.b16 %v1574
        %v1732 = vunpack.c.l.b16 %v1575
        %v1733 = vunpack.c.h.b16 %v1575
        %v1734 = vunpack.c.l.b16 %v1576
        %v1735 = vunpack.c.h.b16 %v1576
        %v1736 = vunpack.c.l.b16 %v1577
        %v1737 = vunpack.c.h.b16 %v1577
        %v1738 = vunpack.c.l.b16 %v1578
        %v1739 = vunpack.c.h.b16 %v1578
        %v1740 = vunpack.c.l.b16 %v1579
        %v1741 = vunpack.c.h.b16 %v1579
        %v1742 = vunpack.c.l.b16 %v1580
        %v1743 = vunpack.c.h.b16 %v1580
        %v1744 = vunpack.c.l.b16 %v1581
        %v1745 = vunpack.c.h.b16 %v1581
        %v1746 = vunpack.c.l.b16 %v1582
        %v1747 = vunpack.c.h.b16 %v1582
        %v1748 = vunpack.c.l.b16 %v1583
        %v1749 = vunpack.c.h.b16 %v1583
        %v1750 = vunpack.c.l.b16 %v1584
        %v1751 = vunpack.c.h.b16 %v1584
        %v1752 = vunpack.c.l.b16 %v1585
        %v1753 = vunpack.c.h.b16 %v1585
        %v1754 = vpack.c.b16 %v1712, %v1706
        %v1755 = vpack.c.b16 %v1713, %v1707
        %v1756 = vpack.c.b16 %v1714, %v1708
        %v1757 = vpack.c.b16 %v1715, %v1709
        %v1758 = vpack.c.b16 %v1716, %v1710
        %v1759 = vpack.c.b16 %v1717, %v1711
        %v1760 = vpack.c.b16 %v1724, %v1718
        %v1761 = vpack.c.b16 %v1725, %v1719
        %v1762 = vpack.c.b16 %v1726, %v1720
        %v1763 = vpack.c.b16 %v1727, %v1721
        %v1764 = vpack.c.b16 %v1728, %v1722
        %v1765 = vpack.c.b16 %v1729, %v1723
        %v1766 = vpack.c.b16 %v1736, %v1730
        %v1767 = vpack.c.b16 %v1737, %v1731
        %v1768 = vpack.c.b16 %v1738, %v1732
        %v1769 = vpack.c.b16 %v1739, %v1733
        %v1770 = vpack.c.b16 %v1740, %v1734
        %v1771 = vpack.c.b16 %v1741, %v1735
        %v1772 = vpack.c.b16 %v1748, %v1742
        %v1773 = vpack.c.b16 %v1749, %v1743
        %v1774 = vpack.c.b16 %v1750, %v1744
        %v1775 = vpack.c.b16 %v1751, %v1745
        %v1776 = vpack.c.b16 %v1752, %v1746
        %v1777 = vpack.c.b16 %v1753, %v1747
        %1802 = vmatprep.subr.bf16.mxu0 %v1587
        %1803 = vmatpush1.bf16.msra.mxu0 %v1586
        %1804 = vmatprep.subr.bf16.mxu0 %v1589
        %1805 = vmatpush1.bf16.msra.mxu0 %v1588
        %1806 = vmatprep.subr.bf16.mxu0 %v1591
        %1807 = vmatpush1.bf16.msra.mxu0 %v1590
        %1808 = vmatprep.subr.bf16.mxu0 %v1593
        %1809 = vmatpush1.bf16.msra.mxu0 %v1592
        %1810 = vmatprep.subr.bf16.mxu0 %v1595
        %1811 = vmatpush1.bf16.msra.mxu0 %v1594
        %1812 = vmatprep.subr.bf16.mxu0 %v1597
        %1813 = vmatpush1.bf16.msra.mxu0 %v1596
        %1814 = vmatprep.subr.bf16.mxu0 %v1599
        %1815 = vmatpush1.bf16.msra.mxu0 %v1598
        %1816 = vmatprep.subr.bf16.mxu0 %v1601
        %1817 = vmatpush1.bf16.msra.mxu0 %v1600
        %1818 = vmatprep.subr.bf16.mxu0 %v1603
        %1819 = vmatpush1.bf16.msra.mxu0 %v1602
        %1820 = vmatprep.subr.bf16.mxu0 %v1605
        %1821 = vmatpush1.bf16.msra.mxu0 %v1604
        %1822 = vmatprep.subr.bf16.mxu0 %v1607
        %1823 = vmatpush1.bf16.msra.mxu0 %v1606
        %1824 = vmatprep.subr.bf16.mxu0 %v1609
        %1825 = vmatpush1.bf16.msra.mxu0 %v1608
        %1826 = vmatprep.subr.bf16.mxu0 %v1611
        %1827 = vmatpush1.bf16.msra.mxu0 %v1610
        %1828 = vmatprep.subr.bf16.mxu0 %v1613
        %1829 = vmatpush1.bf16.msra.mxu0 %v1612
        %1830 = vmatprep.subr.bf16.mxu0 %v1615
        %1831 = vmatpush1.bf16.msra.mxu0 %v1614
        %1832 = vmatprep.subr.bf16.mxu0 %v1617
        %1833 = vmatpush1.bf16.msra.mxu0 %v1616
        %1834 = vmatprep.mubr.bf16.mxu0 %v1755
        %1835 = vmatmul.mubr.bf16.gmra.mrb[0].mxu0 %v1754
        %v1836 = vpop.f32.mrb[0].mxu0
        %v1837 = vadd.f32 0.0, %v1836
        %v1838 = vpop.f32.mrb[0].mxu0
        %v1839 = vadd.f32 0.0, %v1838
        %v1840 = vpop.f32.mrb[0].mxu0
        %v1841 = vadd.f32 0.0, %v1840
        %v1842 = vpop.f32.mrb[0].mxu0
        %v1843 = vadd.f32 0.0, %v1842
        %1844 = vmatprep.mubr.bf16.mxu0 %v1761
        %1845 = vmatmul.mubr.bf16.gmra.mrb[0].mxu0 %v1760
        %v1846 = vpop.f32.mrb[0].mxu0
        %v1847 = vadd.f32 0.0, %v1846
        %v1848 = vpop.f32.mrb[0].mxu0
        %v1849 = vadd.f32 0.0, %v1848
        %v1850 = vpop.f32.mrb[0].mxu0
        %v1851 = vadd.f32 0.0, %v1850
        %v1852 = vpop.f32.mrb[0].mxu0
        %v1853 = vadd.f32 0.0, %v1852
        %1854 = vmatprep.mubr.bf16.mxu0 %v1767
        %1855 = vmatmul.mubr.bf16.gmra.mrb[0].mxu0 %v1766
        %v1856 = vpop.f32.mrb[0].mxu0
        %v1857 = vadd.f32 0.0, %v1856
        %v1858 = vpop.f32.mrb[0].mxu0
        %v1859 = vadd.f32 0.0, %v1858
        %v1860 = vpop.f32.mrb[0].mxu0
        %v1861 = vadd.f32 0.0, %v1860
        %v1862 = vpop.f32.mrb[0].mxu0
        %v1863 = vadd.f32 0.0, %v1862
        %1864 = vmatprep.mubr.bf16.mxu0 %v1773
        %1865 = vmatmul.mubr.bf16.gmra.mrb[0].mxu0 %v1772
        %v1866 = vpop.f32.mrb[0].mxu0
        %v1867 = vadd.f32 0.0, %v1866
        %v1868 = vpop.f32.mrb[0].mxu0
        %v1869 = vadd.f32 0.0, %v1868
        %v1870 = vpop.f32.mrb[0].mxu0
        %v1871 = vadd.f32 0.0, %v1870
        %v1872 = vpop.f32.mrb[0].mxu0
        %v1873 = vadd.f32 0.0, %v1872
        %1874 = vdwg.mxu0
        %1875 = vmatprep.subr.bf16.mxu0 %v1619
        %1876 = vmatpush1.bf16.msra.mxu0 %v1618
        %1877 = vmatprep.subr.bf16.mxu0 %v1621
        %1878 = vmatpush1.bf16.msra.mxu0 %v1620
        %1879 = vmatprep.subr.bf16.mxu0 %v1623
        %1880 = vmatpush1.bf16.msra.mxu0 %v1622
        %1881 = vmatprep.subr.bf16.mxu0 %v1625
        %1882 = vmatpush1.bf16.msra.mxu0 %v1624
        %1883 = vmatprep.subr.bf16.mxu0 %v1627
        %1884 = vmatpush1.bf16.msra.mxu0 %v1626
        %1885 = vmatprep.subr.bf16.mxu0 %v1629
        %1886 = vmatpush1.bf16.msra.mxu0 %v1628
        %1887 = vmatprep.subr.bf16.mxu0 %v1631
        %1888 = vmatpush1.bf16.msra.mxu0 %v1630
        %1889 = vmatprep.subr.bf16.mxu0 %v1633
        %1890 = vmatpush1.bf16.msra.mxu0 %v1632
        %1891 = vmatprep.subr.bf16.mxu0 %v1635
        %1892 = vmatpush1.bf16.msra.mxu0 %v1634
        %1893 = vmatprep.subr.bf16.mxu0 %v1637
        %1894 = vmatpush1.bf16.msra.mxu0 %v1636
        %1895 = vmatprep.subr.bf16.mxu0 %v1639
        %1896 = vmatpush1.bf16.msra.mxu0 %v1638
        %1897 = vmatprep.subr.bf16.mxu0 %v1641
        %1898 = vmatpush1.bf16.msra.mxu0 %v1640
        %1899 = vmatprep.subr.bf16.mxu0 %v1643
        %1900 = vmatpush1.bf16.msra.mxu0 %v1642
        %1901 = vmatprep.subr.bf16.mxu0 %v1645
        %1902 = vmatpush1.bf16.msra.mxu0 %v1644
        %1903 = vmatprep.subr.bf16.mxu0 %v1647
        %1904 = vmatpush1.bf16.msra.mxu0 %v1646
        %1905 = vmatprep.subr.bf16.mxu0 %v1649
        %1906 = vmatpush1.bf16.msra.mxu0 %v1648
        %1907 = vmatprep.mubr.bf16.mxu0 %v1757
        %1908 = vmatmul.mubr.bf16.gmra.mrb[0].mxu0 %v1756
        %v1909 = vpop.f32.mrb[0].mxu0
        %v1910 = vadd.f32 %v1837, %v1909
        %v1911 = vpop.f32.mrb[0].mxu0
        %v1912 = vadd.f32 %v1839, %v1911
        %v1913 = vpop.f32.mrb[0].mxu0
        %v1914 = vadd.f32 %v1841, %v1913
        %v1915 = vpop.f32.mrb[0].mxu0
        %v1916 = vadd.f32 %v1843, %v1915
        %1917 = vmatprep.mubr.bf16.mxu0 %v1763
        %1918 = vmatmul.mubr.bf16.gmra.mrb[0].mxu0 %v1762
        %v1919 = vpop.f32.mrb[0].mxu0
        %v1920 = vadd.f32 %v1847, %v1919
        %v1921 = vpop.f32.mrb[0].mxu0
        %v1922 = vadd.f32 %v1849, %v1921
        %v1923 = vpop.f32.mrb[0].mxu0
        %v1924 = vadd.f32 %v1851, %v1923
        %v1925 = vpop.f32.mrb[0].mxu0
        %v1926 = vadd.f32 %v1853, %v1925
        %1927 = vmatprep.mubr.bf16.mxu0 %v1769
        %1928 = vmatmul.mubr.bf16.gmra.mrb[0].mxu0 %v1768
        %v1929 = vpop.f32.mrb[0].mxu0
        %v1930 = vadd.f32 %v1857, %v1929
        %v1931 = vpop.f32.mrb[0].mxu0
        %v1932 = vadd.f32 %v1859, %v1931
        %v1933 = vpop.f32.mrb[0].mxu0
        %v1934 = vadd.f32 %v1861, %v1933
        %v1935 = vpop.f32.mrb[0].mxu0
        %v1936 = vadd.f32 %v1863, %v1935
        %1937 = vmatprep.mubr.bf16.mxu0 %v1775
        %1938 = vmatmul.mubr.bf16.gmra.mrb[0].mxu0 %v1774
        %v1939 = vpop.f32.mrb[0].mxu0
        %v1940 = vadd.f32 %v1867, %v1939
        %v1941 = vpop.f32.mrb[0].mxu0
        %v1942 = vadd.f32 %v1869, %v1941
        %v1943 = vpop.f32.mrb[0].mxu0
        %v1944 = vadd.f32 %v1871, %v1943
        %v1945 = vpop.f32.mrb[0].mxu0
        %v1946 = vadd.f32 %v1873, %v1945
        %1947 = vdwg.mxu0
        %1948 = vmatprep.subr.bf16.mxu0 %v1651
        %1949 = vmatpush1.bf16.msra.mxu0 %v1650
        %1950 = vmatprep.subr.bf16.mxu0 %v1653
        %1951 = vmatpush1.bf16.msra.mxu0 %v1652
        %1952 = vmatprep.subr.bf16.mxu0 %v1655
        %1953 = vmatpush1.bf16.msra.mxu0 %v1654
        %1954 = vmatprep.subr.bf16.mxu0 %v1657
        %1955 = vmatpush1.bf16.msra.mxu0 %v1656
        %1956 = vmatprep.subr.bf16.mxu0 %v1659
        %1957 = vmatpush1.bf16.msra.mxu0 %v1658
        %1958 = vmatprep.subr.bf16.mxu0 %v1661
        %1959 = vmatpush1.bf16.msra.mxu0 %v1660
        %1960 = vmatprep.subr.bf16.mxu0 %v1663
        %1961 = vmatpush1.bf16.msra.mxu0 %v1662
        %1962 = vmatprep.subr.bf16.mxu0 %v1665
        %1963 = vmatpush1.bf16.msra.mxu0 %v1664
        %1964 = vmatprep.subr.bf16.mxu0 %v1667
        %1965 = vmatpush1.bf16.msra.mxu0 %v1666
        %1966 = vmatprep.subr.bf16.mxu0 %v1669
        %1967 = vmatpush1.bf16.msra.mxu0 %v1668
        %1968 = vmatprep.subr.bf16.mxu0 %v1671
        %1969 = vmatpush1.bf16.msra.mxu0 %v1670
        %1970 = vmatprep.subr.bf16.mxu0 %v1673
        %1971 = vmatpush1.bf16.msra.mxu0 %v1672
        %1972 = vmatprep.subr.bf16.mxu0 %v1675
        %1973 = vmatpush1.bf16.msra.mxu0 %v1674
        %1974 = vmatprep.subr.bf16.mxu0 %v1677
        %1975 = vmatpush1.bf16.msra.mxu0 %v1676
        %1976 = vmatprep.subr.bf16.mxu0 %v1679
        %1977 = vmatpush1.bf16.msra.mxu0 %v1678
        %1978 = vmatprep.subr.bf16.mxu0 %v1681
        %1979 = vmatpush1.bf16.msra.mxu0 %v1680
        %1980 = vmatprep.mubr.bf16.mxu0 %v1759
        %1981 = vmatmul.mubr.bf16.gmra.mrb[0].mxu0 %v1758
        %v1982 = vpop.f32.mrb[0].mxu0
        %v1983 = vadd.f32 %v1910, %v1982
        %v1984 = vpop.f32.mrb[0].mxu0
        %v1985 = vadd.f32 %v1912, %v1984
        %v1986 = vpop.f32.mrb[0].mxu0
        %v1987 = vadd.f32 %v1914, %v1986
        %v1988 = vpop.f32.mrb[0].mxu0
        %v1989 = vadd.f32 %v1916, %v1988
        %1990 = vmatprep.mubr.bf16.mxu0 %v1765
        %1991 = vmatmul.mubr.bf16.gmra.mrb[0].mxu0 %v1764
        %v1992 = vpop.f32.mrb[0].mxu0
        %v1993 = vadd.f32 %v1920, %v1992
        %v1994 = vpop.f32.mrb[0].mxu0
        %v1995 = vadd.f32 %v1922, %v1994
        %v1996 = vpop.f32.mrb[0].mxu0
        %v1997 = vadd.f32 %v1924, %v1996
        %v1998 = vpop.f32.mrb[0].mxu0
        %v1999 = vadd.f32 %v1926, %v1998
        %2000 = vmatprep.mubr.bf16.mxu0 %v1771
        %2001 = vmatmul.mubr.bf16.gmra.mrb[0].mxu0 %v1770
        %v2002 = vpop.f32.mrb[0].mxu0
        %v2003 = vadd.f32 %v1930, %v2002
        %v2004 = vpop.f32.mrb[0].mxu0
        %v2005 = vadd.f32 %v1932, %v2004
        %v2006 = vpop.f32.mrb[0].mxu0
        %v2007 = vadd.f32 %v1934, %v2006
        %v2008 = vpop.f32.mrb[0].mxu0
        %v2009 = vadd.f32 %v1936, %v2008
        %2010 = vmatprep.mubr.bf16.mxu0 %v1777
        %2011 = vmatmul.mubr.bf16.gmra.mrb[0].mxu0 %v1776
        %v2012 = vpop.f32.mrb[0].mxu0
        %v2013 = vadd.f32 %v1940, %v2012
        %v2014 = vpop.f32.mrb[0].mxu0
        %v2015 = vadd.f32 %v1942, %v2014
        %v2016 = vpop.f32.mrb[0].mxu0
        %v2017 = vadd.f32 %v1944, %v2016
        %v2018 = vpop.f32.mrb[0].mxu0
        %v2019 = vadd.f32 %v1946, %v2018
        %2020 = vdwg.mxu0
        %v2021 = vld [vmem:[%s308] sm:$0xff]
        %v2022 = vld [vmem:[%s308 + $0x8] sm:$0xff]
        %v2023 = vld [vmem:[%s308 + $0x10] sm:$0xff]
        %v2024 = vld [vmem:[%s308 + $0x18] sm:$0xff]
        %v2025 = vld [vmem:[%s308 + $0x20] sm:$0xff]
        %v2026 = vld [vmem:[%s308 + $0x28] sm:$0xff]
        %v2027 = vld [vmem:[%s308 + $0x30] sm:$0xff]
        %v2028 = vld [vmem:[%s308 + $0x38] sm:$0xff]
        %v2029 = vmul.f32 %v1983, %v2021
        %v2030 = vmul.f32 %v1985, %v2022
        %v2031 = vmul.f32 %v1987, %v2023
        %v2032 = vmul.f32 %v1989, %v2024
        %v2033 = vmul.f32 %v1993, %v2025
        %v2034 = vmul.f32 %v1995, %v2026
        %v2035 = vmul.f32 %v1997, %v2027
        %v2036 = vmul.f32 %v1999, %v2028
        %v2037 = vmul.f32 %v2003, %v2021
        %v2038 = vmul.f32 %v2005, %v2022
        %v2039 = vmul.f32 %v2007, %v2023
        %v2040 = vmul.f32 %v2009, %v2024
        %v2041 = vmul.f32 %v2013, %v2025
        %v2042 = vmul.f32 %v2015, %v2026
        %v2043 = vmul.f32 %v2017, %v2027
        %v2044 = vmul.f32 %v2019, %v2028
        %v2045 = vadd.f32 %v2029, %v2031
        %v2046 = vadd.f32 %v2045, %v2033
        %v2047 = vadd.f32 %v2046, %v2035
        %v2048 = vrot.slane %v2047, 4
        %v2049 = vadd.f32 %v2047, %v2048
        %v2050 = vrot.slane %v2049, 2
        %v2051 = vadd.f32 %v2049, %v2050
        %v2052 = vrot.slane %v2051, 1
        %v2053 = vadd.f32 %v2051, %v2052
        %v2054 = vadd.f32 %v2030, %v2032
        %v2055 = vadd.f32 %v2054, %v2034
        %v2056 = vadd.f32 %v2055, %v2036
        %v2057 = vrot.slane %v2056, 4
        %v2058 = vadd.f32 %v2056, %v2057
        %v2059 = vrot.slane %v2058, 2
        %v2060 = vadd.f32 %v2058, %v2059
        %v2061 = vrot.slane %v2060, 1
        %v2062 = vadd.f32 %v2060, %v2061
        %v2063 = vadd.f32 %v2037, %v2039
        %v2064 = vadd.f32 %v2063, %v2041
        %v2065 = vadd.f32 %v2064, %v2043
        %v2066 = vrot.slane %v2065, 4
        %v2067 = vadd.f32 %v2065, %v2066
        %v2068 = vrot.slane %v2067, 2
        %v2069 = vadd.f32 %v2067, %v2068
        %v2070 = vrot.slane %v2069, 1
        %v2071 = vadd.f32 %v2069, %v2070
        %v2072 = vadd.f32 %v2038, %v2040
        %v2073 = vadd.f32 %v2072, %v2042
        %v2074 = vadd.f32 %v2073, %v2044
        %v2075 = vrot.slane %v2074, 4
        %v2076 = vadd.f32 %v2074, %v2075
        %v2077 = vrot.slane %v2076, 2
        %v2078 = vadd.f32 %v2076, %v2077
        %v2079 = vrot.slane %v2078, 1
        %v2080 = vadd.f32 %v2078, %v2079
        %v2081 = vld [vmem:[%s355] sm:$0x3]
        %v2083 = vlaneseq
        %v2084 = vshrl.u32 %v2083, 7
        %v2085 = vsub.s32 0, %v2084
        %v2086 = vrot.slane %v2081, %v2085
        %v2087 = vlaneseq
        %v2088 = vshrl.u32 %v2087, 7
        %v2089 = vsub.s32 1, %v2088
        %v2090 = vrot.slane %v2081, %v2089
        %v2093 = vadd.f32 %v2053, %v2086
        %v2094 = vadd.f32 %v2062, %v2090
        %v2095 = vadd.f32 %v2071, %v2086
        %v2096 = vadd.f32 %v2080, %v2090
        %v2101 = vcombine.low %v2093, %v2094
        %v2103 = vunpack.c.l.s4 1983009808
        %v2104 = vunpack.c.0.s8 %v2103
        %v2105 = vlaneseq
        %v2106 = vshrl.u32 %v2105, 7
        %v2107 = vsub.s32 %v2104, %v2106
        %v2108 = vrot.slane %v2101, %v2107
        %v2109 = vcombine.low %v2095, %v2096
        %v2111 = vunpack.c.l.s4 1983009808
        %v2112 = vunpack.c.0.s8 %v2111
        %v2113 = vlaneseq
        %v2114 = vshrl.u32 %v2113, 7
        %v2115 = vsub.s32 %v2112, %v2114
        %v2116 = vrot.slane %v2109, %v2115
        %vm2117 = vcmask 1044484
        %v2118 = vsel %vm2117, %v2108, %v2108
        %vm2119 = vcmask 1046534
        %v2120 = vsel %vm2119, %v2108, %v2118
        %v2121 = vrot.slane %v2116, 7
        %vm2122 = vcmask 1041409
        %v2123 = vsel %vm2122, %v2121, %v2120
        %vm2124 = vcmask 1043459
        %v2125 = vsel %vm2124, %v2121, %v2123
        %vm2126 = vcmask 1045509
        %v2127 = vsel %vm2126, %v2121, %v2125
        %vm2128 = vcmask 1047559
        %v2129 = vsel %vm2128, %v2121, %v2127
        %2131 = vst [vmem:[%s348] sm:$0xf] %v2129
        %s2132 = sand.u32 %s159, 1
        %s2133 = scalar_lea.sflag [#allocation5], %s2132
        %s2134 = sand.u32 %s159, 1
        %s2135 = smul.addr %s2134, 4
        %s2136 = scalar_lea.vmem [#allocation11], %s2135
        // Predicated region
        $region57: #{tpu_custom_call.1} parent=39 // pred_check
          %p2137 = pneg %p169
        $region58: #{tpu_custom_call.1} parent=39 // pred_check_branch
          %2139 = sbr.rel (%p2137) target = $region60
        $region59: #{tpu_custom_call.1} parent=39 // pred_region
          %s2140 = smul.u32 2, %s26
          %s2142 = ssub.s32 64, 64
          %2143 = vsyncadd %s2133, %s2142
          %s2144 = smul.addr %s2140, 32
          %s2145 = scalar_lea.hbm %s5, %s2144
          %s2147 = sshll.u32 %s2136, 4
          %s2148 = int_to_ptr.vmem [resolvable:$true] %s2147
          %2150 = dma.vmem_to_hbm [thread:$0]  %s2148, 64, %s2145, %s2133
        $region60: #{tpu_custom_call.1} parent=39 // pred_fallthru
          _
      $region40: #{tpu_custom_call.1} parent=5 // pred_fallthru
        _
      %p2151 = scmp.le.s32.totalorder 2, %s21
      // Predicated region
      $region61: #{tpu_custom_call.1} parent=5 // pred_check
        %p2152 = pneg %p2151
      $region62: #{tpu_custom_call.1} parent=5 // pred_check_branch
        %2154 = sbr.rel (%p2152) target = $region64
      $region63: #{tpu_custom_call.1} parent=5 // pred_region
        %s2155 = ssub.s32 %s21, 2
        // Predicated region
        $region65: #{tpu_custom_call.1} parent=63 // pred_check
          %p2156 = pneg %p175
        $region66: #{tpu_custom_call.1} parent=63 // pred_check_branch
          %2158 = sbr.rel (%p2156) target = $region68
        $region67: #{tpu_custom_call.1} parent=63 // pred_region
          %s2159 = sand.u32 %s160, 1
          %s2160 = scalar_lea.sflag [#allocation5], %s2159
          %s2161 = sand.u32 %s160, 1
          %s2162 = smul.addr %s2161, 4
          %s2163 = scalar_lea.vmem [#allocation11], %s2162
          %2164 = dma.done %s2160, 64
        $region68: #{tpu_custom_call.1} parent=63 // pred_fallthru
          _
      $region64: #{tpu_custom_call.1} parent=5 // pred_fallthru
        _
    $region6: #{tpu_custom_call.1} parent=1 // loop_footer
      %s25 = sadd.s32 1, %s21
    $region7: #{tpu_custom_call.1} parent=1 // loop_footer_branch
      %20 = sbr.rel target = $region3
    $region8: #{tpu_custom_call.1} parent=1 // loop_exit
      _
    %2165 = vsyncpa [#allocation4], 1
    %s2166 = scalar_lea.sflag [#allocation4], 1
    %2167 = vsyncpa %s2166, 1
    %2168 = vsyncpa [#allocation7], 1
    %s2169 = scalar_lea.sflag [#allocation7], 1
    %2170 = vsyncpa %s2169, 1
    %2171 = vsyncpa [#allocation10], 1
    %s2172 = scalar_lea.sflag [#allocation10], 1
    %2173 = vsyncpa %s2172, 1
    %2174 = vsyncpa [#allocation5], 1
    %s2175 = scalar_lea.sflag [#allocation5], 1
    %2176 = vsyncpa %s2175, 1

</llo_original>
